<compile_context>
chip_gen: v7x
topology: tpu7x:2x2x1
jax: 0.10.0
libtpu: 0.0.40
codegen_flags: <defaults>
</compile_context>

<pallas_src>
import functools
import math

import jax
import jax.numpy as jnp
from jax import lax
from jax.experimental import pallas as pl
from jax.experimental.pallas import tpu as pltpu


# ----------------------------------------------------------------------------
# Kernel
# ----------------------------------------------------------------------------
def make_midinet_kernel(num_heads: int, dim_head: int, eps: float = 1e-5):
    H, dh = num_heads, dim_head
    D = H * dh
    scale = 1.0 / math.sqrt(dh)

    def _gelu_tanh(x):
        # matches torch nn.GELU(approximate='tanh')
        c = math.sqrt(2.0 / math.pi)
        return 0.5 * x * (1.0 + jnp.tanh(c * (x + 0.044715 * x * x * x)))

    def _tile_heads(a):
        # (S, w) -> (H*S, H*w) block replication, built purely from lane/sublane
        # concats (no reshapes / relayouts).
        a = jnp.concatenate([a] * H, axis=1)
        return jnp.concatenate([a] * H, axis=0)

    def _scale_norm(v, g):
        # reference: g * x / clamp(||x||, eps)  ==  g * x * rsqrt(max(||x||^2, eps^2))
        ss = jnp.sum(v * v, axis=-1, keepdims=True)
        return (g * v) * lax.rsqrt(jnp.maximum(ss, eps * eps))

    def kernel(x_ref,                          # (1, S, D)   f32   (per-batch block)
               g1_ref, g2_ref,                 # (1, 1, 1)   f32   (per-layer)
               wqkv_ref, bqkv_ref,             # (1,D,D+2dh) bf16 / (1,1,D+2dh) f32
               wo_ref, bo_ref,                 # (1,D,D) bf16 / (1,1,D) f32
               w1_ref, b1_ref,                 # (1,D,F) bf16 / (1,1,F) f32
               w2_ref, b2_ref,                 # (1,F,D) bf16 / (1,1,D) f32
               hmask_ref,                      # (H*S, D)    f32   block-diag 0/1
               segsum_ref,                     # (H*S, H*S)  f32   block-diag ones
               cbias_ref,                      # (S, H*S)    f32   causal bias
               embT_ref, bout_ref,             # (D, Vp) bf16 / (1, Vp) f32
               o_ref,                          # (1, S, Vp)  f32
               x_vmem):                        # (S, D)      f32   resident activations
        layer = pl.program_id(1)

        @pl.when(layer == 0)
        def _():
            x_vmem[...] = x_ref[0]

        x = x_vmem[...]                                            # (S, D) f32

        # ---------------- multi-query causal self-attention ----------------
        n1 = _scale_norm(x, g1_ref[0]).astype(jnp.bfloat16)
        qkv = jnp.dot(n1, wqkv_ref[0],
                      preferred_element_type=jnp.float32) + bqkv_ref[0]   # (S, D+2dh)
        q = (qkv[:, :D] * scale).astype(jnp.bfloat16)              # (S, D) heads on lanes
        k = qkv[:, D:D + dh]                                       # (S, dh) shared K
        v = qkv[:, D + dh:]                                        # (S, dh) shared V

        hmask = hmask_ref[...]
        kexp = (_tile_heads(k) * hmask).astype(jnp.bfloat16)       # (H*S, D)
        vexp = (_tile_heads(v) * hmask).astype(jnp.bfloat16)       # (H*S, D)

        # scores[s, h*S + t] = (q_h[s] . k[t]) / sqrt(dh)  — contract last dims.
        s = lax.dot_general(q, kexp, (((1,), (1,)), ((), ())),
                            preferred_element_type=jnp.float32)    # (S, H*S)
        s = s + cbias_ref[...]                                     # causal mask
        m = jnp.max(s, axis=-1, keepdims=True)                     # row max (exact stabilizer)
        e = jnp.exp(s - m)
        den = jnp.dot(e, segsum_ref[...],
                      preferred_element_type=jnp.float32)          # per-head sums, broadcast
        p = e / jnp.maximum(den, 1e-30)                            # exact softmax

        ctx = jnp.dot(p.astype(jnp.bfloat16), vexp,
                      preferred_element_type=jnp.float32)          # (S, D) head-major
        attn = jnp.dot(ctx.astype(jnp.bfloat16), wo_ref[0],
                       preferred_element_type=jnp.float32) + bo_ref[0]
        x = x + attn                                               # residual 1

        # ---------------- GELU(tanh) feedforward ----------------
        n2 = _scale_norm(x, g2_ref[0]).astype(jnp.bfloat16)
        h1 = jnp.dot(n2, w1_ref[0], preferred_element_type=jnp.float32) + b1_ref[0]
        h1 = _gelu_tanh(h1).astype(jnp.bfloat16)
        ff = jnp.dot(h1, w2_ref[0], preferred_element_type=jnp.float32) + b2_ref[0]
        x = x + ff                                                 # residual 2

        x_vmem[...] = x

        # ---------------- tied logits projection (last layer only) ----------------
        @pl.when(layer == pl.num_programs(1) - 1)
        def _():
            logits = jnp.dot(x.astype(jnp.bfloat16), embT_ref[...],
                             preferred_element_type=jnp.float32) + bout_ref[...]
            o_ref[0] = logits.astype(o_ref.dtype)

    return kernel


# ----------------------------------------------------------------------------
# One-time parameter preparation (hoisted out of the forward pass)
# ----------------------------------------------------------------------------
def positional_encoding(seq_len, dim_model):
    inv_freq = 1.0 / (10000.0 ** (jnp.arange(0, dim_model, 2, dtype=jnp.float32)
                                  / dim_model))
    positions = jnp.arange(seq_len, dtype=jnp.float32)
    sinusoid = jnp.einsum("i,j->ij", positions, inv_freq)
    return jnp.concatenate([jnp.sin(sinusoid), jnp.cos(sinusoid)], axis=-1)


def prepare_midinet_params(emb, layer_params, num_heads, dim_head, seq_len,
                           out_bias=None):
    """Call ONCE: stacks / transposes / casts weights and builds small constant
    tables (masks, causal bias, positional encoding) in kernel layout."""
    H, dh = num_heads, dim_head
    D = H * dh
    L = len(layer_params)
    V = emb.shape[0]
    S = seq_len
    Vp = ((V + 127) // 128) * 128
    f32, bf16 = jnp.float32, jnp.bfloat16

    def stack(name):
        return jnp.stack([p[name] for p in layer_params])

    # torch Linear weights are (out, in); kernel wants (in, out).
    wqkv = jnp.transpose(stack('wqkv'), (0, 2, 1)).astype(bf16)      # (L, D, D+2dh)
    bqkv = stack('bqkv').astype(f32)[:, None, :]                     # (L, 1, D+2dh)
    wo = jnp.transpose(stack('wout'), (0, 2, 1)).astype(bf16)        # (L, D, D)
    bo = stack('bout').astype(f32)[:, None, :]                       # (L, 1, D)
    w1 = jnp.transpose(stack('w1'), (0, 2, 1)).astype(bf16)          # (L, D, F)
    b1 = stack('b1').astype(f32)[:, None, :]                         # (L, 1, F)
    w2 = jnp.transpose(stack('w2'), (0, 2, 1)).astype(bf16)          # (L, F, D)
    b2 = stack('b2').astype(f32)[:, None, :]                         # (L, 1, D)
    g1 = jnp.stack([p['g1'].reshape(()) for p in layer_params]
                   ).astype(f32).reshape(L, 1, 1)
    g2 = jnp.stack([p['g2'].reshape(()) for p in layer_params]
                   ).astype(f32).reshape(L, 1, 1)

    # constant tables for the heads-on-lanes MQA layout
    row_head = jnp.arange(H * S) // S          # head of score/ctx row index j = h*S + t
    col_head = jnp.arange(H * dh) // dh        # head of model column c = h*dh + d
    hmask = (row_head[:, None] == col_head[None, :]).astype(f32)     # (H*S, D)
    segsum = (row_head[:, None] == row_head[None, :]).astype(f32)    # (H*S, H*S)
    qpos = jnp.arange(S)[:, None]
    kpos = jnp.arange(S)[None, :]
    causal = jnp.where(kpos > qpos, -1e30, 0.0).astype(f32)          # (S, S)
    cbias = jnp.tile(causal, (1, H))                                 # (S, H*S)
    pe = positional_encoding(S, D).astype(f32)                       # (S, D)

    # tied output projection, lane-dense (vocab zero-padded to multiple of 128)
    embT = jnp.zeros((D, Vp), bf16).at[:, :V].set(emb.T.astype(bf16))
    if out_bias is None:
        out_bias = jnp.zeros((V,), f32)
    bout = jnp.zeros((1, Vp), f32).at[0, :V].set(out_bias.astype(f32))

    return dict(emb=emb.astype(f32), pe=pe, g1=g1, g2=g2,
                wqkv=wqkv, bqkv=bqkv, wo=wo, bo=bo,
                w1=w1, b1=b1, w2=w2, b2=b2,
                hmask=hmask, segsum=segsum, cbias=cbias,
                embT=embT, bout=bout)


# ----------------------------------------------------------------------------
# Forward pass
# ----------------------------------------------------------------------------
def midinet_forward(tokens, params, *, num_heads, dim_head, eps=1e-5):
    H, dh = num_heads, dim_head
    D = H * dh
    B, S = tokens.shape
    L = params['wqkv'].shape[0]
    F = params['w1'].shape[2]
    Vp = params['embT'].shape[1]
    V = params['emb'].shape[0]
    HS = H * S
    assert params['cbias'].shape == (S, HS), "params prepared for a different seq_len"

    # glue: embedding gather + sinusoidal positional encoding (outside the kernel)
    x = jnp.take(params['emb'], tokens, axis=0) * math.sqrt(D) + params['pe'][None]
    x = x.astype(jnp.float32)

    kernel = make_midinet_kernel(num_heads=H, dim_head=dh, eps=eps)

    def wspec(*dims):      # per-layer stacked tensor: block over leading L axis
        return pl.BlockSpec((1,) + dims, lambda b, l: (l,) + (0,) * len(dims))

    def cspec(*dims):      # constant table: same (resident) block every step
        return pl.BlockSpec(dims, lambda b, l: (0,) * len(dims))

    in_specs = [
        pl.BlockSpec((1, S, D), lambda b, l: (b, 0, 0)),          # x (per batch)
        wspec(1, 1), wspec(1, 1),                                 # g1, g2
        wspec(D, D + 2 * dh), wspec(1, D + 2 * dh),               # wqkv, bqkv
        wspec(D, D), wspec(1, D),                                 # wo, bo
        wspec(D, F), wspec(1, F),                                 # w1, b1
        wspec(F, D), wspec(1, D),                                 # w2, b2
        cspec(HS, D), cspec(HS, HS), cspec(S, HS),                # hmask, segsum, cbias
        cspec(D, Vp), cspec(1, Vp),                               # embT, bout
    ]
    out_specs = pl.BlockSpec((1, S, Vp), lambda b, l: (b, 0, 0))

    logits_padded = pl.pallas_call(
        kernel,
        out_shape=jax.ShapeDtypeStruct((B, S, Vp), jnp.float32),
        grid=(B, L),
        in_specs=in_specs,
        out_specs=out_specs,
        scratch_shapes=[pltpu.VMEM((S, D), jnp.float32)],
        compiler_params=pltpu.CompilerParams(
            dimension_semantics=("parallel", "arbitrary")),
    )(x, params['g1'], params['g2'], params['wqkv'], params['bqkv'],
      params['wo'], params['bo'], params['w1'], params['b1'],
      params['w2'], params['b2'], params['hmask'], params['segsum'],
      params['cbias'], params['embT'], params['bout'])

    return logits_padded[:, :, :V]


# ----------------------------------------------------------------------------
# Demo
# ----------------------------------------------------------------------------
if __name__ == "__main__":
    # config: vocab=64, heads=4, dim_head=8 (D=32), ffn=64, layers=2
    VOCAB, H, DH, DFF, LAYERS = 64, 4, 8, 64, 2
    D = H * DH
    B, S = 2, 8

    key = jax.random.PRNGKey(0)
    keys = jax.random.split(key, 2 + LAYERS * 4)

    emb = jax.random.uniform(keys[0], (VOCAB, D), jnp.float32, -0.1, 0.1)
    tokens = jax.random.randint(keys[1], (B, S), 0, VOCAB)

    def xavier(k, out_f, in_f):
        bound = math.sqrt(6.0 / (in_f + out_f))
        return jax.random.uniform(k, (out_f, in_f), jnp.float32, -bound, bound)

    layer_params = []
    ki = 2
    for _ in range(LAYERS):
        layer_params.append(dict(
            g1=jnp.full((1,), math.sqrt(D), jnp.float32),
            g2=jnp.full((1,), math.sqrt(D), jnp.float32),
            wqkv=xavier(keys[ki], D + 2 * DH, D),
            bqkv=jnp.zeros((D + 2 * DH,), jnp.float32),
            wout=xavier(keys[ki + 1], D, D),
            bout=jnp.zeros((D,), jnp.float32),
            w1=xavier(keys[ki + 2], DFF, D),
            b1=jnp.zeros((DFF,), jnp.float32),
            w2=xavier(keys[ki + 3], D, DFF),
            b2=jnp.zeros((D,), jnp.float32),
        ))
        ki += 4

    # one-time prep (hoisted out of the forward path), then a jitted forward
    params = prepare_midinet_params(emb, layer_params, num_heads=H, dim_head=DH,
                                    seq_len=S)
    fwd = jax.jit(functools.partial(midinet_forward, num_heads=H, dim_head=DH))

    logits = fwd(tokens, params)
    jax.block_until_ready(logits)
    assert logits.shape == (B, S, VOCAB)
    assert bool(jnp.isfinite(logits).all())
    print("KERNEL_OK")
</pallas_src>

<mosaic_0001>
module attributes {stable_mosaic.version = 11 : i64} {
  func.func @kernel(%arg0: i32, %arg1: i32, %arg2: memref<1x8x32xf32, #tpu.memory_space<vmem>>, %arg3: memref<1x1x1xf32, #tpu.memory_space<vmem>>, %arg4: memref<1x1x1xf32, #tpu.memory_space<vmem>>, %arg5: memref<1x32x48xbf16, #tpu.memory_space<vmem>>, %arg6: memref<1x1x48xf32, #tpu.memory_space<vmem>>, %arg7: memref<1x32x32xbf16, #tpu.memory_space<vmem>>, %arg8: memref<1x1x32xf32, #tpu.memory_space<vmem>>, %arg9: memref<1x32x64xbf16, #tpu.memory_space<vmem>>, %arg10: memref<1x1x64xf32, #tpu.memory_space<vmem>>, %arg11: memref<1x64x32xbf16, #tpu.memory_space<vmem>>, %arg12: memref<1x1x32xf32, #tpu.memory_space<vmem>>, %arg13: memref<32x32xf32, #tpu.memory_space<vmem>>, %arg14: memref<32x32xf32, #tpu.memory_space<vmem>>, %arg15: memref<8x32xf32, #tpu.memory_space<vmem>>, %arg16: memref<32x128xbf16, #tpu.memory_space<vmem>>, %arg17: memref<1x128xf32, #tpu.memory_space<vmem>>, %arg18: memref<1x8x128xf32, #tpu.memory_space<vmem>>, %arg19: memref<8x32xf32, #tpu.memory_space<vmem>>) attributes {dimension_semantics = [#tpu.dimension_semantics<parallel>, #tpu.dimension_semantics<arbitrary>], iteration_bounds = array<i64: 2, 2>, scalar_prefetch = 0 : i64, scratch_operands = 1 : i64, tpu.core_type = #tpu.core_type<tc>, window_params = [{transform_indices = @transform_0, window_bounds = array<i64: 1, 8, 32>}, {transform_indices = @transform_1, window_bounds = array<i64: 1, 1, 1>}, {transform_indices = @transform_2, window_bounds = array<i64: 1, 1, 1>}, {transform_indices = @transform_3, window_bounds = array<i64: 1, 32, 48>}, {transform_indices = @transform_4, window_bounds = array<i64: 1, 1, 48>}, {transform_indices = @transform_5, window_bounds = array<i64: 1, 32, 32>}, {transform_indices = @transform_6, window_bounds = array<i64: 1, 1, 32>}, {transform_indices = @transform_7, window_bounds = array<i64: 1, 32, 64>}, {transform_indices = @transform_8, window_bounds = array<i64: 1, 1, 64>}, {transform_indices = @transform_9, window_bounds = array<i64: 1, 64, 32>}, {transform_indices = @transform_10, window_bounds = array<i64: 1, 1, 32>}, {pipeline_mode = #tpu.pipeline_mode<synchronous>, transform_indices = @transform_11, window_bounds = array<i64: 32, 32>}, {pipeline_mode = #tpu.pipeline_mode<synchronous>, transform_indices = @transform_12, window_bounds = array<i64: 32, 32>}, {pipeline_mode = #tpu.pipeline_mode<synchronous>, transform_indices = @transform_13, window_bounds = array<i64: 8, 32>}, {pipeline_mode = #tpu.pipeline_mode<synchronous>, transform_indices = @transform_14, window_bounds = array<i64: 32, 128>}, {pipeline_mode = #tpu.pipeline_mode<synchronous>, transform_indices = @transform_15, window_bounds = array<i64: 1, 128>}, {transform_indices = @transform_16, window_bounds = array<i64: 1, 8, 128>}]} {
    %c0_i32 = arith.constant 0 : i32
    %0 = arith.cmpi eq, %arg1, %c0_i32 : i32
    %1 = arith.extui %0 : i1 to i32
    %c0_i32_0 = arith.constant 0 : i32
    %2 = arith.cmpi ne, %1, %c0_i32_0 : i32
    scf.if %2 {
      %c0_58 = arith.constant 0 : index
      %c0_59 = arith.constant 0 : index
      %c0_60 = arith.constant 0 : index
      %109 = vector.load %arg2[%c0_58, %c0_59, %c0_60] : memref<1x8x32xf32, #tpu.memory_space<vmem>>, vector<1x8x32xf32>
      %110 = vector.shape_cast %109 : vector<1x8x32xf32> to vector<8x32xf32>
      %c0_61 = arith.constant 0 : index
      %c0_62 = arith.constant 0 : index
      %111 = vector.load %arg19[%c0_61, %c0_62] : memref<8x32xf32, #tpu.memory_space<vmem>>, vector<8x32xf32>
      tpu.vector_store %arg19[%c0_61, %c0_62], %110 {strides = array<i32>} : memref<8x32xf32, #tpu.memory_space<vmem>>, vector<8x32xf32>,
    } else {
    }
    %c0 = arith.constant 0 : index
    %c0_1 = arith.constant 0 : index
    %3 = vector.load %arg19[%c0, %c0_1] : memref<8x32xf32, #tpu.memory_space<vmem>>, vector<8x32xf32>
    %c0_2 = arith.constant 0 : index
    %c0_3 = arith.constant 0 : index
    %c0_4 = arith.constant 0 : index
    %4 = vector.load %arg3[%c0_2, %c0_3, %c0_4] : memref<1x1x1xf32, #tpu.memory_space<vmem>>, vector<1x1x1xf32>
    %5 = vector.shape_cast %4 : vector<1x1x1xf32> to vector<1x1xf32>
    %6 = arith.mulf %3, %3 : vector<8x32xf32>
    %cst = arith.constant dense<0.000000e+00> : vector<8xf32>
    %7 = vector.multi_reduction <add>, %6, %cst [1] : vector<8x32xf32> to vector<8xf32>
    %8 = vector.shape_cast %7 : vector<8xf32> to vector<8x1xf32>
    %9 = vector.broadcast %5 : vector<1x1xf32> to vector<8x32xf32>
    %10 = arith.mulf %9, %3 : vector<8x32xf32>
    %cst_5 = arith.constant 1.000000e-10 : f32
    %11 = vector.broadcast %cst_5 : f32 to vector<8x1xf32>
    %12 = arith.maximumf %8, %11 : vector<8x1xf32>
    %13 = math.rsqrt %12 : vector<8x1xf32>
    %14 = vector.broadcast %13 : vector<8x1xf32> to vector<8x32xf32>
    %15 = arith.mulf %10, %14 : vector<8x32xf32>
    %16 = arith.truncf %15 : vector<8x32xf32> to vector<8x32xbf16>
    %c0_6 = arith.constant 0 : index
    %c0_7 = arith.constant 0 : index
    %c0_8 = arith.constant 0 : index
    %17 = vector.load %arg5[%c0_6, %c0_7, %c0_8] : memref<1x32x48xbf16, #tpu.memory_space<vmem>>, vector<1x32x48xbf16>
    %18 = vector.shape_cast %17 : vector<1x32x48xbf16> to vector<32x48xbf16>
    %cst_9 = arith.constant dense<0.000000e+00> : vector<8x48xf32>
    %19 = tpu.matmul %16, %18, %cst_9 {dimension_numbers = #tpu.dot_dimension_numbers<[1], [0], [0], [1], [0, 0, 1, 1], [], []>} : vector<8x32xbf16>, vector<32x48xbf16>, vector<8x48xf32> -> vector<8x48xf32>
    %c0_10 = arith.constant 0 : index
    %c0_11 = arith.constant 0 : index
    %c0_12 = arith.constant 0 : index
    %20 = vector.load %arg6[%c0_10, %c0_11, %c0_12] : memref<1x1x48xf32, #tpu.memory_space<vmem>>, vector<1x1x48xf32>
    %21 = vector.shape_cast %20 : vector<1x1x48xf32> to vector<1x48xf32>
    %22 = vector.broadcast %21 : vector<1x48xf32> to vector<8x48xf32>
    %23 = arith.addf %19, %22 : vector<8x48xf32>
    %24 = vector.extract_strided_slice %23 {offsets = [0, 0], sizes = [8, 32], strides = [1, 1]} : vector<8x48xf32> to vector<8x32xf32>
    %cst_13 = arith.constant 0.353553385 : f32
    %25 = vector.broadcast %cst_13 : f32 to vector<8x32xf32>
    %26 = arith.mulf %24, %25 : vector<8x32xf32>
    %27 = arith.truncf %26 : vector<8x32xf32> to vector<8x32xbf16>
    %28 = vector.extract_strided_slice %23 {offsets = [0, 32], sizes = [8, 8], strides = [1, 1]} : vector<8x48xf32> to vector<8x8xf32>
    %29 = vector.extract_strided_slice %23 {offsets = [0, 40], sizes = [8, 8], strides = [1, 1]} : vector<8x48xf32> to vector<8x8xf32>
    %c0_14 = arith.constant 0 : index
    %c0_15 = arith.constant 0 : index
    %30 = vector.load %arg13[%c0_14, %c0_15] : memref<32x32xf32, #tpu.memory_space<vmem>>, vector<32x32xf32>
    %31 = tpu.concatenate %28, %28, %28, %28 in 1 : vector<8x8xf32>, vector<8x8xf32>, vector<8x8xf32>, vector<8x8xf32> -> vector<8x32xf32>
    %32 = tpu.concatenate %31, %31, %31, %31 in 0 : vector<8x32xf32>, vector<8x32xf32>, vector<8x32xf32>, vector<8x32xf32> -> vector<32x32xf32>
    %33 = arith.mulf %32, %30 : vector<32x32xf32>
    %34 = arith.truncf %33 : vector<32x32xf32> to vector<32x32xbf16>
    %35 = tpu.concatenate %29, %29, %29, %29 in 1 : vector<8x8xf32>, vector<8x8xf32>, vector<8x8xf32>, vector<8x8xf32> -> vector<8x32xf32>
    %36 = tpu.concatenate %35, %35, %35, %35 in 0 : vector<8x32xf32>, vector<8x32xf32>, vector<8x32xf32>, vector<8x32xf32> -> vector<32x32xf32>
    %37 = arith.mulf %36, %30 : vector<32x32xf32>
    %38 = arith.truncf %37 : vector<32x32xf32> to vector<32x32xbf16>
    %cst_16 = arith.constant dense<0.000000e+00> : vector<8x32xf32>
    %39 = tpu.matmul %27, %34, %cst_16 {dimension_numbers = #tpu.dot_dimension_numbers<[1], [1], [0], [0], [0, 0, 1, 0], [], []>} : vector<8x32xbf16>, vector<32x32xbf16>, vector<8x32xf32> -> vector<8x32xf32>
    %c0_17 = arith.constant 0 : index
    %c0_18 = arith.constant 0 : index
    %40 = vector.load %arg15[%c0_17, %c0_18] : memref<8x32xf32, #tpu.memory_space<vmem>>, vector<8x32xf32>
    %41 = arith.addf %39, %40 : vector<8x32xf32>
    %cst_19 = arith.constant dense<0xFF800000> : vector<8xf32>
    %42 = vector.multi_reduction <maximumf>, %41, %cst_19 [1] : vector<8x32xf32> to vector<8xf32>
    %43 = vector.shape_cast %42 : vector<8xf32> to vector<8x1xf32>
    %44 = vector.broadcast %43 : vector<8x1xf32> to vector<8x32xf32>
    %45 = arith.subf %41, %44 : vector<8x32xf32>
    %46 = math.exp %45 : vector<8x32xf32>
    %c0_20 = arith.constant 0 : index
    %c0_21 = arith.constant 0 : index
    %47 = vector.load %arg14[%c0_20, %c0_21] : memref<32x32xf32, #tpu.memory_space<vmem>>, vector<32x32xf32>
    %cst_22 = arith.constant dense<0.000000e+00> : vector<8x32xf32>
    %48 = tpu.matmul %46, %47, %cst_22 {dimension_numbers = #tpu.dot_dimension_numbers<[1], [0], [0], [1], [0, 0, 1, 1], [], []>} : vector<8x32xf32>, vector<32x32xf32>, vector<8x32xf32> -> vector<8x32xf32>
    %cst_23 = arith.constant 1.000000e-30 : f32
    %49 = vector.broadcast %cst_23 : f32 to vector<8x32xf32>
    %50 = arith.maximumf %48, %49 : vector<8x32xf32>
    %51 = arith.divf %46, %50 : vector<8x32xf32>
    %52 = arith.truncf %51 : vector<8x32xf32> to vector<8x32xbf16>
    %cst_24 = arith.constant dense<0.000000e+00> : vector<8x32xf32>
    %53 = tpu.matmul %52, %38, %cst_24 {dimension_numbers = #tpu.dot_dimension_numbers<[1], [0], [0], [1], [0, 0, 1, 1], [], []>} : vector<8x32xbf16>, vector<32x32xbf16>, vector<8x32xf32> -> vector<8x32xf32>
    %54 = arith.truncf %53 : vector<8x32xf32> to vector<8x32xbf16>
    %c0_25 = arith.constant 0 : index
    %c0_26 = arith.constant 0 : index
    %c0_27 = arith.constant 0 : index
    %55 = vector.load %arg7[%c0_25, %c0_26, %c0_27] : memref<1x32x32xbf16, #tpu.memory_space<vmem>>, vector<1x32x32xbf16>
    %56 = vector.shape_cast %55 : vector<1x32x32xbf16> to vector<32x32xbf16>
    %cst_28 = arith.constant dense<0.000000e+00> : vector<8x32xf32>
    %57 = tpu.matmul %54, %56, %cst_28 {dimension_numbers = #tpu.dot_dimension_numbers<[1], [0], [0], [1], [0, 0, 1, 1], [], []>} : vector<8x32xbf16>, vector<32x32xbf16>, vector<8x32xf32> -> vector<8x32xf32>
    %c0_29 = arith.constant 0 : index
    %c0_30 = arith.constant 0 : index
    %c0_31 = arith.constant 0 : index
    %58 = vector.load %arg8[%c0_29, %c0_30, %c0_31] : memref<1x1x32xf32, #tpu.memory_space<vmem>>, vector<1x1x32xf32>
    %59 = vector.shape_cast %58 : vector<1x1x32xf32> to vector<1x32xf32>
    %60 = vector.broadcast %59 : vector<1x32xf32> to vector<8x32xf32>
    %61 = arith.addf %57, %60 : vector<8x32xf32>
    %62 = arith.addf %3, %61 : vector<8x32xf32>
    %c0_32 = arith.constant 0 : index
    %c0_33 = arith.constant 0 : index
    %c0_34 = arith.constant 0 : index
    %63 = vector.load %arg4[%c0_32, %c0_33, %c0_34] : memref<1x1x1xf32, #tpu.memory_space<vmem>>, vector<1x1x1xf32>
    %64 = vector.shape_cast %63 : vector<1x1x1xf32> to vector<1x1xf32>
    %65 = arith.mulf %62, %62 : vector<8x32xf32>
    %cst_35 = arith.constant dense<0.000000e+00> : vector<8xf32>
    %66 = vector.multi_reduction <add>, %65, %cst_35 [1] : vector<8x32xf32> to vector<8xf32>
    %67 = vector.shape_cast %66 : vector<8xf32> to vector<8x1xf32>
    %68 = vector.broadcast %64 : vector<1x1xf32> to vector<8x32xf32>
    %69 = arith.mulf %68, %62 : vector<8x32xf32>
    %cst_36 = arith.constant 1.000000e-10 : f32
    %70 = vector.broadcast %cst_36 : f32 to vector<8x1xf32>
    %71 = arith.maximumf %67, %70 : vector<8x1xf32>
    %72 = math.rsqrt %71 : vector<8x1xf32>
    %73 = vector.broadcast %72 : vector<8x1xf32> to vector<8x32xf32>
    %74 = arith.mulf %69, %73 : vector<8x32xf32>
    %75 = arith.truncf %74 : vector<8x32xf32> to vector<8x32xbf16>
    %c0_37 = arith.constant 0 : index
    %c0_38 = arith.constant 0 : index
    %c0_39 = arith.constant 0 : index
    %76 = vector.load %arg9[%c0_37, %c0_38, %c0_39] : memref<1x32x64xbf16, #tpu.memory_space<vmem>>, vector<1x32x64xbf16>
    %77 = vector.shape_cast %76 : vector<1x32x64xbf16> to vector<32x64xbf16>
    %cst_40 = arith.constant dense<0.000000e+00> : vector<8x64xf32>
    %78 = tpu.matmul %75, %77, %cst_40 {dimension_numbers = #tpu.dot_dimension_numbers<[1], [0], [0], [1], [0, 0, 1, 1], [], []>} : vector<8x32xbf16>, vector<32x64xbf16>, vector<8x64xf32> -> vector<8x64xf32>
    %c0_41 = arith.constant 0 : index
    %c0_42 = arith.constant 0 : index
    %c0_43 = arith.constant 0 : index
    %79 = vector.load %arg10[%c0_41, %c0_42, %c0_43] : memref<1x1x64xf32, #tpu.memory_space<vmem>>, vector<1x1x64xf32>
    %80 = vector.shape_cast %79 : vector<1x1x64xf32> to vector<1x64xf32>
    %81 = vector.broadcast %80 : vector<1x64xf32> to vector<8x64xf32>
    %82 = arith.addf %78, %81 : vector<8x64xf32>
    %cst_44 = arith.constant 5.000000e-01 : f32
    %83 = vector.broadcast %cst_44 : f32 to vector<8x64xf32>
    %84 = arith.mulf %83, %82 : vector<8x64xf32>
    %cst_45 = arith.constant 4.471500e-02 : f32
    %85 = vector.broadcast %cst_45 : f32 to vector<8x64xf32>
    %86 = arith.mulf %85, %82 : vector<8x64xf32>
    %87 = arith.mulf %86, %82 : vector<8x64xf32>
    %88 = arith.mulf %87, %82 : vector<8x64xf32>
    %89 = arith.addf %82, %88 : vector<8x64xf32>
    %cst_46 = arith.constant 0.797884583 : f32
    %90 = vector.broadcast %cst_46 : f32 to vector<8x64xf32>
    %91 = arith.mulf %90, %89 : vector<8x64xf32>
    %92 = math.tanh %91 : vector<8x64xf32>
    %cst_47 = arith.constant 1.000000e+00 : f32
    %93 = vector.broadcast %cst_47 : f32 to vector<8x64xf32>
    %94 = arith.addf %93, %92 : vector<8x64xf32>
    %95 = arith.mulf %84, %94 : vector<8x64xf32>
    %96 = arith.truncf %95 : vector<8x64xf32> to vector<8x64xbf16>
    %c0_48 = arith.constant 0 : index
    %c0_49 = arith.constant 0 : index
    %c0_50 = arith.constant 0 : index
    %97 = vector.load %arg11[%c0_48, %c0_49, %c0_50] : memref<1x64x32xbf16, #tpu.memory_space<vmem>>, vector<1x64x32xbf16>
    %98 = vector.shape_cast %97 : vector<1x64x32xbf16> to vector<64x32xbf16>
    %cst_51 = arith.constant dense<0.000000e+00> : vector<8x32xf32>
    %99 = tpu.matmul %96, %98, %cst_51 {dimension_numbers = #tpu.dot_dimension_numbers<[1], [0], [0], [1], [0, 0, 1, 1], [], []>} : vector<8x64xbf16>, vector<64x32xbf16>, vector<8x32xf32> -> vector<8x32xf32>
    %c0_52 = arith.constant 0 : index
    %c0_53 = arith.constant 0 : index
    %c0_54 = arith.constant 0 : index
    %100 = vector.load %arg12[%c0_52, %c0_53, %c0_54] : memref<1x1x32xf32, #tpu.memory_space<vmem>>, vector<1x1x32xf32>
    %101 = vector.shape_cast %100 : vector<1x1x32xf32> to vector<1x32xf32>
    %102 = vector.broadcast %101 : vector<1x32xf32> to vector<8x32xf32>
    %103 = arith.addf %99, %102 : vector<8x32xf32>
    %104 = arith.addf %62, %103 : vector<8x32xf32>
    %c0_55 = arith.constant 0 : index
    %c0_56 = arith.constant 0 : index
    %105 = vector.load %arg19[%c0_55, %c0_56] : memref<8x32xf32, #tpu.memory_space<vmem>>, vector<8x32xf32>
    tpu.vector_store %arg19[%c0_55, %c0_56], %104 {strides = array<i32>} : memref<8x32xf32, #tpu.memory_space<vmem>>, vector<8x32xf32>,
    %c1_i32 = arith.constant 1 : i32
    %106 = arith.cmpi eq, %arg1, %c1_i32 : i32
    %107 = arith.extui %106 : i1 to i32
    %c0_i32_57 = arith.constant 0 : i32
    %108 = arith.cmpi ne, %107, %c0_i32_57 : i32
    scf.if %108 {
      %109 = arith.truncf %104 : vector<8x32xf32> to vector<8x32xbf16>
      %c0_58 = arith.constant 0 : index
      %c0_59 = arith.constant 0 : index
      %110 = vector.load %arg16[%c0_58, %c0_59] : memref<32x128xbf16, #tpu.memory_space<vmem>>, vector<32x128xbf16>
      %cst_60 = arith.constant dense<0.000000e+00> : vector<8x128xf32>
      %111 = tpu.matmul %109, %110, %cst_60 {dimension_numbers = #tpu.dot_dimension_numbers<[1], [0], [0], [1], [0, 0, 1, 1], [], []>} : vector<8x32xbf16>, vector<32x128xbf16>, vector<8x128xf32> -> vector<8x128xf32>
      %c0_61 = arith.constant 0 : index
      %c0_62 = arith.constant 0 : index
      %112 = vector.load %arg17[%c0_61, %c0_62] : memref<1x128xf32, #tpu.memory_space<vmem>>, vector<1x128xf32>
      %113 = vector.broadcast %112 : vector<1x128xf32> to vector<8x128xf32>
      %114 = arith.addf %111, %113 : vector<8x128xf32>
      %c0_63 = arith.constant 0 : index
      %c0_64 = arith.constant 0 : index
      %c0_65 = arith.constant 0 : index
      %115 = vector.load %arg18[%c0_63, %c0_64, %c0_65] : memref<1x8x128xf32, #tpu.memory_space<vmem>>, vector<1x8x128xf32>
      %116 = vector.shape_cast %115 : vector<1x8x128xf32> to vector<8x128xf32>
      %117 = vector.shape_cast %114 : vector<8x128xf32> to vector<1x8x128xf32>
      tpu.vector_store %arg18[%c0_63, %c0_64, %c0_65], %117 {strides = array<i32>} : memref<1x8x128xf32, #tpu.memory_space<vmem>>, vector<1x8x128xf32>,
    } else {
    }
    return
  }
  func.func @transform_0(%arg0: i32, %arg1: i32) -> (i32, i32, i32) {
    %c0_i32 = arith.constant 0 : i32
    %c0_i32_0 = arith.constant 0 : i32
    %c0_i32_1 = arith.constant 0 : i32
    return %arg0, %c0_i32, %c0_i32_0 : i32, i32, i32
  }
  func.func @transform_1(%arg0: i32, %arg1: i32) -> (i32, i32, i32) {
    %c0_i32 = arith.constant 0 : i32
    %c0_i32_0 = arith.constant 0 : i32
    %c0_i32_1 = arith.constant 0 : i32
    return %arg1, %c0_i32, %c0_i32_0 : i32, i32, i32
  }
  func.func @transform_2(%arg0: i32, %arg1: i32) -> (i32, i32, i32) {
    %c0_i32 = arith.constant 0 : i32
    %c0_i32_0 = arith.constant 0 : i32
    %c0_i32_1 = arith.constant 0 : i32
    return %arg1, %c0_i32, %c0_i32_0 : i32, i32, i32
  }
  func.func @transform_3(%arg0: i32, %arg1: i32) -> (i32, i32, i32) {
    %c0_i32 = arith.constant 0 : i32
    %c0_i32_0 = arith.constant 0 : i32
    %c0_i32_1 = arith.constant 0 : i32
    return %arg1, %c0_i32, %c0_i32_0 : i32, i32, i32
  }
  func.func @transform_4(%arg0: i32, %arg1: i32) -> (i32, i32, i32) {
    %c0_i32 = arith.constant 0 : i32
    %c0_i32_0 = arith.constant 0 : i32
    %c0_i32_1 = arith.constant 0 : i32
    return %arg1, %c0_i32, %c0_i32_0 : i32, i32, i32
  }
  func.func @transform_5(%arg0: i32, %arg1: i32) -> (i32, i32, i32) {
    %c0_i32 = arith.constant 0 : i32
    %c0_i32_0 = arith.constant 0 : i32
    %c0_i32_1 = arith.constant 0 : i32
    return %arg1, %c0_i32, %c0_i32_0 : i32, i32, i32
  }
  func.func @transform_6(%arg0: i32, %arg1: i32) -> (i32, i32, i32) {
    %c0_i32 = arith.constant 0 : i32
    %c0_i32_0 = arith.constant 0 : i32
    %c0_i32_1 = arith.constant 0 : i32
    return %arg1, %c0_i32, %c0_i32_0 : i32, i32, i32
  }
  func.func @transform_7(%arg0: i32, %arg1: i32) -> (i32, i32, i32) {
    %c0_i32 = arith.constant 0 : i32
    %c0_i32_0 = arith.constant 0 : i32
    %c0_i32_1 = arith.constant 0 : i32
    return %arg1, %c0_i32, %c0_i32_0 : i32, i32, i32
  }
  func.func @transform_8(%arg0: i32, %arg1: i32) -> (i32, i32, i32) {
    %c0_i32 = arith.constant 0 : i32
    %c0_i32_0 = arith.constant 0 : i32
    %c0_i32_1 = arith.constant 0 : i32
    return %arg1, %c0_i32, %c0_i32_0 : i32, i32, i32
  }
  func.func @transform_9(%arg0: i32, %arg1: i32) -> (i32, i32, i32) {
    %c0_i32 = arith.constant 0 : i32
    %c0_i32_0 = arith.constant 0 : i32
    %c0_i32_1 = arith.constant 0 : i32
    return %arg1, %c0_i32, %c0_i32_0 : i32, i32, i32
  }
  func.func @transform_10(%arg0: i32, %arg1: i32) -> (i32, i32, i32) {
    %c0_i32 = arith.constant 0 : i32
    %c0_i32_0 = arith.constant 0 : i32
    %c0_i32_1 = arith.constant 0 : i32
    return %arg1, %c0_i32, %c0_i32_0 : i32, i32, i32
  }
  func.func @transform_11(%arg0: i32, %arg1: i32) -> (i32, i32) {
    %c0_i32 = arith.constant 0 : i32
    %c0_i32_0 = arith.constant 0 : i32
    %c0_i32_1 = arith.constant 0 : i32
    return %c0_i32, %c0_i32_0 : i32, i32
  }
  func.func @transform_12(%arg0: i32, %arg1: i32) -> (i32, i32) {
    %c0_i32 = arith.constant 0 : i32
    %c0_i32_0 = arith.constant 0 : i32
    %c0_i32_1 = arith.constant 0 : i32
    return %c0_i32, %c0_i32_0 : i32, i32
  }
  func.func @transform_13(%arg0: i32, %arg1: i32) -> (i32, i32) {
    %c0_i32 = arith.constant 0 : i32
    %c0_i32_0 = arith.constant 0 : i32
    %c0_i32_1 = arith.constant 0 : i32
    return %c0_i32, %c0_i32_0 : i32, i32
  }
  func.func @transform_14(%arg0: i32, %arg1: i32) -> (i32, i32) {
    %c0_i32 = arith.constant 0 : i32
    %c0_i32_0 = arith.constant 0 : i32
    %c0_i32_1 = arith.constant 0 : i32
    return %c0_i32, %c0_i32_0 : i32, i32
  }
  func.func @transform_15(%arg0: i32, %arg1: i32) -> (i32, i32) {
    %c0_i32 = arith.constant 0 : i32
    %c0_i32_0 = arith.constant 0 : i32
    %c0_i32_1 = arith.constant 0 : i32
    return %c0_i32, %c0_i32_0 : i32, i32
  }
  func.func @transform_16(%arg0: i32, %arg1: i32) -> (i32, i32, i32) {
    %c0_i32 = arith.constant 0 : i32
    %c0_i32_0 = arith.constant 0 : i32
    %c0_i32_1 = arith.constant 0 : i32
    return %arg0, %c0_i32, %c0_i32_0 : i32, i32, i32
  }
}

</mosaic_0001>

<llo_original>
// kernel: midinet_forward.1
$region0: #{midinet_forward.1}
  #allocation0 [shape = 'u32[]', space=smem, size = 0x4, offset = 0x4, fixed_abs, tag = 'smem constant byte address 0x4 - core index']
  #allocation1 [shape = 'u32[144,128]{1,0:T(1,128)}', space=vmem, size = 0x12000, scoped, tag = 'internal scratch']
  #allocation2 [shape = 'f32[8,32]{1,0:T(8,128)}', space=vmem, size = 0x1000, scoped, tag = 'scratch operand']
  %s0 = inlined_call_operand.vmem [shape: f32[2,8,32], index: 0, kind: input, shape index: {}]
  %s1 = inlined_call_operand.vmem [shape: f32[2,1,1], index: 1, kind: input, shape index: {}]
  %s2 = inlined_call_operand.vmem [shape: f32[2,1,1], index: 2, kind: input, shape index: {}]
  %s3 = inlined_call_operand.vmem [shape: bf16[2,32,48], index: 3, kind: input, shape index: {}]
  %s4 = inlined_call_operand.vmem [shape: f32[2,1,48], index: 4, kind: input, shape index: {}]
  %s5 = inlined_call_operand.vmem [shape: bf16[2,32,32], index: 5, kind: input, shape index: {}]
  %s6 = inlined_call_operand.vmem [shape: f32[2,1,32], index: 6, kind: input, shape index: {}]
  %s7 = inlined_call_operand.vmem [shape: bf16[2,32,64], index: 7, kind: input, shape index: {}]
  %s8 = inlined_call_operand.vmem [shape: f32[2,1,64], index: 8, kind: input, shape index: {}]
  %s9 = inlined_call_operand.vmem [shape: bf16[2,64,32], index: 9, kind: input, shape index: {}]
  %s10 = inlined_call_operand.vmem [shape: f32[2,1,32], index: 10, kind: input, shape index: {}]
  %s11 = inlined_call_operand.vmem [shape: f32[32,32], index: 11, kind: input, shape index: {}]
  %s12 = inlined_call_operand.vmem [shape: f32[32,32], index: 12, kind: input, shape index: {}]
  %s13 = inlined_call_operand.vmem [shape: f32[8,32], index: 13, kind: input, shape index: {}]
  %s14 = inlined_call_operand.vmem [shape: bf16[32,128], index: 14, kind: input, shape index: {}]
  %s15 = inlined_call_operand.vmem [shape: f32[1,128], index: 15, kind: input, shape index: {}]
  %s16 = inlined_call_operand.hbm [shape: f32[2,8,128], index: 16, kind: output, shape index: {}]
  %s17 = sld [smem:[#allocation0]]
  $region105: #{midinet_forward.1} parent=0
    _
  %s19 = ssub.s32 1, %s17
  %s20 = scalar_select 0, %s19, %s17
  $region1: #{midinet_forward.1} parent=0
    #allocation3 [shape = 'u8[8192]{0}', space=vmem, size = 0x2000, scoped, tag = 'output window, operand 0']
    #allocation4 [shape = 's32[2]{0}', space=sflag, size = 0x8, scoped, tag = 'scoped memory for midinet_forward.1']
    %21 = vsyncpa [#allocation4], 0
    %s22 = scalar_lea.sflag [#allocation4], 1
    %23 = vsyncpa %s22, 0
    loop: start=0, step=1, limit=6
    $region2: #{midinet_forward.1} parent=1 // loop_pre_header
      _
    $region3: #{midinet_forward.1} parent=1 // loop_header
      %s25 = sphi 0, %s29
      %p26 = scmp.ge.s32.totalorder %s25, 6
      %s32 = sphi 0, %s44
      %s33 = sphi 0, %s40
      %s34 = sphi 0, %s32
      %s35 = sphi 0, %s33
      %s36 = sphi 0, %s34
      %s37 = sphi 0, %s35
      %s47 = sphi 0, %s49
      %s50 = sphi 0, %s47
      %s51 = sphi 0, %s50
      %s67 = sphi 0, %s51
      %s73 = sphi 0, %s75
      %s76 = sphi 0, %s73
      %s77 = sphi 0, %s76
      %s93 = sphi 0, %s77
      %s99 = sphi 0, %s101
      %s102 = sphi 0, %s99
      %s103 = sphi 0, %s102
      %s119 = sphi 0, %s103
      %s125 = sphi 0, %s127
      %s128 = sphi 0, %s125
      %s129 = sphi 0, %s128
      %s145 = sphi 0, %s129
      %s151 = sphi 0, %s153
      %s154 = sphi 0, %s151
      %s155 = sphi 0, %s154
      %s171 = sphi 0, %s155
      %s177 = sphi 0, %s179
      %s180 = sphi 0, %s177
      %s181 = sphi 0, %s180
      %s197 = sphi 0, %s181
      %s203 = sphi 0, %s205
      %s206 = sphi 0, %s203
      %s207 = sphi 0, %s206
      %s223 = sphi 0, %s207
      %s229 = sphi 0, %s231
      %s232 = sphi 0, %s229
      %s233 = sphi 0, %s232
      %s249 = sphi 0, %s233
      %s255 = sphi 0, %s257
      %s258 = sphi 0, %s255
      %s259 = sphi 0, %s258
      %s275 = sphi 0, %s259
      %s281 = sphi 0, %s283
      %s284 = sphi 0, %s281
      %s285 = sphi 0, %s284
      %s301 = sphi 0, %s285
      %s307 = sphi 0, %s309
      %s310 = sphi 0, %s307
      %s311 = sphi 0, %s310
      %s327 = sphi 0, %s311
      %s331 = sphi 0, %s331
      %s333 = sphi 0, %s331
      %s334 = sphi 0, %s333
      %s348 = sphi 0, %s334
      %s352 = sphi 0, %s352
      %s354 = sphi 0, %s352
      %s355 = sphi 0, %s354
      %s369 = sphi 0, %s355
      %s373 = sphi 0, %s373
      %s375 = sphi 0, %s373
      %s376 = sphi 0, %s375
      %s390 = sphi 0, %s376
      %s394 = sphi 0, %s394
      %s396 = sphi 0, %s394
      %s397 = sphi 0, %s396
      %s411 = sphi 0, %s397
      %s415 = sphi 0, %s415
      %s417 = sphi 0, %s415
      %s418 = sphi 0, %s417
      %s432 = sphi 0, %s418
      %s438 = sphi 0, %s440
      %s441 = sphi 0, %s438
      %s442 = sphi 0, %s441
      %s458 = sphi 0, %s442
    $region4: #{midinet_forward.1} parent=1 // loop_header_branch
      %28 = sbr.rel (%p26) target = $region8
    $region5: #{midinet_forward.1} parent=1 // loop_body
      %s30 = ssub.s32 %s25, 1
      %s31 = ssub.s32 %s25, 2
      %s38 = sadd.s32 1, %s33
      %p39 = scmp.ge.s32.totalorder %s38, 2
      %s40 = scalar_select %p39, 0, %s38
      %s41 = sadd.s32 1, %s32
      %s42 = scalar_select %p39, %s41, %s32
      %p43 = scmp.ge.s32.totalorder %s42, 2
      %s44 = scalar_select %p43, 0, %s42
      %s45 = ssub.s32 %s32, %s44
      %p46 = scmp.eq.s32.totalorder %s45, 0
      %s48 = sadd.s32 %s47, 1
      %s49 = scalar_select %p46, %s47, %s48
      %p52 = pneg %p46
      %p53 = scmp.eq.s32.totalorder %s25, 3
      %p54 = por %p52, %p53
      %p55 = scmp.ne.s32.totalorder %s47, %s50
      %p56 = scmp.eq.s32.totalorder %s25, 0
      %p57 = por %p55, %p56
      %p58 = scmp.ne.s32.totalorder %s47, %s50
      %p59 = scmp.eq.s32.totalorder %s30, 3
      %p60 = por %p58, %p59
      %p61 = scmp.ne.s32.totalorder %s50, %s51
      %p62 = scmp.eq.s32.totalorder %s30, 0
      %p63 = por %p61, %p62
      %p64 = scmp.ne.s32.totalorder %s50, %s51
      %p65 = scmp.eq.s32.totalorder %s31, 3
      %p66 = por %p64, %p65
      %p68 = scmp.ne.s32.totalorder %s51, %s67
      %p69 = scmp.eq.s32.totalorder %s31, 0
      %p70 = por %p68, %p69
      %s71 = ssub.s32 %s33, %s40
      %p72 = scmp.eq.s32.totalorder %s71, 0
      %s74 = sadd.s32 %s73, 1
      %s75 = scalar_select %p72, %s73, %s74
      %p78 = pneg %p72
      %p79 = scmp.eq.s32.totalorder %s25, 3
      %p80 = por %p78, %p79
      %p81 = scmp.ne.s32.totalorder %s73, %s76
      %p82 = scmp.eq.s32.totalorder %s25, 0
      %p83 = por %p81, %p82
      %p84 = scmp.ne.s32.totalorder %s73, %s76
      %p85 = scmp.eq.s32.totalorder %s30, 3
      %p86 = por %p84, %p85
      %p87 = scmp.ne.s32.totalorder %s76, %s77
      %p88 = scmp.eq.s32.totalorder %s30, 0
      %p89 = por %p87, %p88
      %p90 = scmp.ne.s32.totalorder %s76, %s77
      %p91 = scmp.eq.s32.totalorder %s31, 3
      %p92 = por %p90, %p91
      %p94 = scmp.ne.s32.totalorder %s77, %s93
      %p95 = scmp.eq.s32.totalorder %s31, 0
      %p96 = por %p94, %p95
      %s97 = ssub.s32 %s33, %s40
      %p98 = scmp.eq.s32.totalorder %s97, 0
      %s100 = sadd.s32 %s99, 1
      %s101 = scalar_select %p98, %s99, %s100
      %p104 = pneg %p98
      %p105 = scmp.eq.s32.totalorder %s25, 3
      %p106 = por %p104, %p105
      %p107 = scmp.ne.s32.totalorder %s99, %s102
      %p108 = scmp.eq.s32.totalorder %s25, 0
      %p109 = por %p107, %p108
      %p110 = scmp.ne.s32.totalorder %s99, %s102
      %p111 = scmp.eq.s32.totalorder %s30, 3
      %p112 = por %p110, %p111
      %p113 = scmp.ne.s32.totalorder %s102, %s103
      %p114 = scmp.eq.s32.totalorder %s30, 0
      %p115 = por %p113, %p114
      %p116 = scmp.ne.s32.totalorder %s102, %s103
      %p117 = scmp.eq.s32.totalorder %s31, 3
      %p118 = por %p116, %p117
      %p120 = scmp.ne.s32.totalorder %s103, %s119
      %p121 = scmp.eq.s32.totalorder %s31, 0
      %p122 = por %p120, %p121
      %s123 = ssub.s32 %s33, %s40
      %p124 = scmp.eq.s32.totalorder %s123, 0
      %s126 = sadd.s32 %s125, 1
      %s127 = scalar_select %p124, %s125, %s126
      %p130 = pneg %p124
      %p131 = scmp.eq.s32.totalorder %s25, 3
      %p132 = por %p130, %p131
      %p133 = scmp.ne.s32.totalorder %s125, %s128
      %p134 = scmp.eq.s32.totalorder %s25, 0
      %p135 = por %p133, %p134
      %p136 = scmp.ne.s32.totalorder %s125, %s128
      %p137 = scmp.eq.s32.totalorder %s30, 3
      %p138 = por %p136, %p137
      %p139 = scmp.ne.s32.totalorder %s128, %s129
      %p140 = scmp.eq.s32.totalorder %s30, 0
      %p141 = por %p139, %p140
      %p142 = scmp.ne.s32.totalorder %s128, %s129
      %p143 = scmp.eq.s32.totalorder %s31, 3
      %p144 = por %p142, %p143
      %p146 = scmp.ne.s32.totalorder %s129, %s145
      %p147 = scmp.eq.s32.totalorder %s31, 0
      %p148 = por %p146, %p147
      %s149 = ssub.s32 %s33, %s40
      %p150 = scmp.eq.s32.totalorder %s149, 0
      %s152 = sadd.s32 %s151, 1
      %s153 = scalar_select %p150, %s151, %s152
      %p156 = pneg %p150
      %p157 = scmp.eq.s32.totalorder %s25, 3
      %p158 = por %p156, %p157
      %p159 = scmp.ne.s32.totalorder %s151, %s154
      %p160 = scmp.eq.s32.totalorder %s25, 0
      %p161 = por %p159, %p160
      %p162 = scmp.ne.s32.totalorder %s151, %s154
      %p163 = scmp.eq.s32.totalorder %s30, 3
      %p164 = por %p162, %p163
      %p165 = scmp.ne.s32.totalorder %s154, %s155
      %p166 = scmp.eq.s32.totalorder %s30, 0
      %p167 = por %p165, %p166
      %p168 = scmp.ne.s32.totalorder %s154, %s155
      %p169 = scmp.eq.s32.totalorder %s31, 3
      %p170 = por %p168, %p169
      %p172 = scmp.ne.s32.totalorder %s155, %s171
      %p173 = scmp.eq.s32.totalorder %s31, 0
      %p174 = por %p172, %p173
      %s175 = ssub.s32 %s33, %s40
      %p176 = scmp.eq.s32.totalorder %s175, 0
      %s178 = sadd.s32 %s177, 1
      %s179 = scalar_select %p176, %s177, %s178
      %p182 = pneg %p176
      %p183 = scmp.eq.s32.totalorder %s25, 3
      %p184 = por %p182, %p183
      %p185 = scmp.ne.s32.totalorder %s177, %s180
      %p186 = scmp.eq.s32.totalorder %s25, 0
      %p187 = por %p185, %p186
      %p188 = scmp.ne.s32.totalorder %s177, %s180
      %p189 = scmp.eq.s32.totalorder %s30, 3
      %p190 = por %p188, %p189
      %p191 = scmp.ne.s32.totalorder %s180, %s181
      %p192 = scmp.eq.s32.totalorder %s30, 0
      %p193 = por %p191, %p192
      %p194 = scmp.ne.s32.totalorder %s180, %s181
      %p195 = scmp.eq.s32.totalorder %s31, 3
      %p196 = por %p194, %p195
      %p198 = scmp.ne.s32.totalorder %s181, %s197
      %p199 = scmp.eq.s32.totalorder %s31, 0
      %p200 = por %p198, %p199
      %s201 = ssub.s32 %s33, %s40
      %p202 = scmp.eq.s32.totalorder %s201, 0
      %s204 = sadd.s32 %s203, 1
      %s205 = scalar_select %p202, %s203, %s204
      %p208 = pneg %p202
      %p209 = scmp.eq.s32.totalorder %s25, 3
      %p210 = por %p208, %p209
      %p211 = scmp.ne.s32.totalorder %s203, %s206
      %p212 = scmp.eq.s32.totalorder %s25, 0
      %p213 = por %p211, %p212
      %p214 = scmp.ne.s32.totalorder %s203, %s206
      %p215 = scmp.eq.s32.totalorder %s30, 3
      %p216 = por %p214, %p215
      %p217 = scmp.ne.s32.totalorder %s206, %s207
      %p218 = scmp.eq.s32.totalorder %s30, 0
      %p219 = por %p217, %p218
      %p220 = scmp.ne.s32.totalorder %s206, %s207
      %p221 = scmp.eq.s32.totalorder %s31, 3
      %p222 = por %p220, %p221
      %p224 = scmp.ne.s32.totalorder %s207, %s223
      %p225 = scmp.eq.s32.totalorder %s31, 0
      %p226 = por %p224, %p225
      %s227 = ssub.s32 %s33, %s40
      %p228 = scmp.eq.s32.totalorder %s227, 0
      %s230 = sadd.s32 %s229, 1
      %s231 = scalar_select %p228, %s229, %s230
      %p234 = pneg %p228
      %p235 = scmp.eq.s32.totalorder %s25, 3
      %p236 = por %p234, %p235
      %p237 = scmp.ne.s32.totalorder %s229, %s232
      %p238 = scmp.eq.s32.totalorder %s25, 0
      %p239 = por %p237, %p238
      %p240 = scmp.ne.s32.totalorder %s229, %s232
      %p241 = scmp.eq.s32.totalorder %s30, 3
      %p242 = por %p240, %p241
      %p243 = scmp.ne.s32.totalorder %s232, %s233
      %p244 = scmp.eq.s32.totalorder %s30, 0
      %p245 = por %p243, %p244
      %p246 = scmp.ne.s32.totalorder %s232, %s233
      %p247 = scmp.eq.s32.totalorder %s31, 3
      %p248 = por %p246, %p247
      %p250 = scmp.ne.s32.totalorder %s233, %s249
      %p251 = scmp.eq.s32.totalorder %s31, 0
      %p252 = por %p250, %p251
      %s253 = ssub.s32 %s33, %s40
      %p254 = scmp.eq.s32.totalorder %s253, 0
      %s256 = sadd.s32 %s255, 1
      %s257 = scalar_select %p254, %s255, %s256
      %p260 = pneg %p254
      %p261 = scmp.eq.s32.totalorder %s25, 3
      %p262 = por %p260, %p261
      %p263 = scmp.ne.s32.totalorder %s255, %s258
      %p264 = scmp.eq.s32.totalorder %s25, 0
      %p265 = por %p263, %p264
      %p266 = scmp.ne.s32.totalorder %s255, %s258
      %p267 = scmp.eq.s32.totalorder %s30, 3
      %p268 = por %p266, %p267
      %p269 = scmp.ne.s32.totalorder %s258, %s259
      %p270 = scmp.eq.s32.totalorder %s30, 0
      %p271 = por %p269, %p270
      %p272 = scmp.ne.s32.totalorder %s258, %s259
      %p273 = scmp.eq.s32.totalorder %s31, 3
      %p274 = por %p272, %p273
      %p276 = scmp.ne.s32.totalorder %s259, %s275
      %p277 = scmp.eq.s32.totalorder %s31, 0
      %p278 = por %p276, %p277
      %s279 = ssub.s32 %s33, %s40
      %p280 = scmp.eq.s32.totalorder %s279, 0
      %s282 = sadd.s32 %s281, 1
      %s283 = scalar_select %p280, %s281, %s282
      %p286 = pneg %p280
      %p287 = scmp.eq.s32.totalorder %s25, 3
      %p288 = por %p286, %p287
      %p289 = scmp.ne.s32.totalorder %s281, %s284
      %p290 = scmp.eq.s32.totalorder %s25, 0
      %p291 = por %p289, %p290
      %p292 = scmp.ne.s32.totalorder %s281, %s284
      %p293 = scmp.eq.s32.totalorder %s30, 3
      %p294 = por %p292, %p293
      %p295 = scmp.ne.s32.totalorder %s284, %s285
      %p296 = scmp.eq.s32.totalorder %s30, 0
      %p297 = por %p295, %p296
      %p298 = scmp.ne.s32.totalorder %s284, %s285
      %p299 = scmp.eq.s32.totalorder %s31, 3
      %p300 = por %p298, %p299
      %p302 = scmp.ne.s32.totalorder %s285, %s301
      %p303 = scmp.eq.s32.totalorder %s31, 0
      %p304 = por %p302, %p303
      %s305 = ssub.s32 %s33, %s40
      %p306 = scmp.eq.s32.totalorder %s305, 0
      %s308 = sadd.s32 %s307, 1
      %s309 = scalar_select %p306, %s307, %s308
      %p312 = pneg %p306
      %p313 = scmp.eq.s32.totalorder %s25, 3
      %p314 = por %p312, %p313
      %p315 = scmp.ne.s32.totalorder %s307, %s310
      %p316 = scmp.eq.s32.totalorder %s25, 0
      %p317 = por %p315, %p316
      %p318 = scmp.ne.s32.totalorder %s307, %s310
      %p319 = scmp.eq.s32.totalorder %s30, 3
      %p320 = por %p318, %p319
      %p321 = scmp.ne.s32.totalorder %s310, %s311
      %p322 = scmp.eq.s32.totalorder %s30, 0
      %p323 = por %p321, %p322
      %p324 = scmp.ne.s32.totalorder %s310, %s311
      %p325 = scmp.eq.s32.totalorder %s31, 3
      %p326 = por %p324, %p325
      %p328 = scmp.ne.s32.totalorder %s311, %s327
      %p329 = scmp.eq.s32.totalorder %s31, 0
      %p330 = por %p328, %p329
      %s332 = sadd.s32 %s331, 1
      %p335 = scmp.eq.s32.totalorder %s25, 3
      %p336 = scmp.ne.s32.totalorder %s331, %s333
      %p337 = scmp.eq.s32.totalorder %s25, 0
      %p338 = por %p336, %p337
      %p339 = scmp.ne.s32.totalorder %s331, %s333
      %p340 = scmp.eq.s32.totalorder %s30, 3
      %p341 = por %p339, %p340
      %p342 = scmp.ne.s32.totalorder %s333, %s334
      %p343 = scmp.eq.s32.totalorder %s30, 0
      %p344 = por %p342, %p343
      %p345 = scmp.ne.s32.totalorder %s333, %s334
      %p346 = scmp.eq.s32.totalorder %s31, 3
      %p347 = por %p345, %p346
      %p349 = scmp.ne.s32.totalorder %s334, %s348
      %p350 = scmp.eq.s32.totalorder %s31, 0
      %p351 = por %p349, %p350
      %s353 = sadd.s32 %s352, 1
      %p356 = scmp.eq.s32.totalorder %s25, 3
      %p357 = scmp.ne.s32.totalorder %s352, %s354
      %p358 = scmp.eq.s32.totalorder %s25, 0
      %p359 = por %p357, %p358
      %p360 = scmp.ne.s32.totalorder %s352, %s354
      %p361 = scmp.eq.s32.totalorder %s30, 3
      %p362 = por %p360, %p361
      %p363 = scmp.ne.s32.totalorder %s354, %s355
      %p364 = scmp.eq.s32.totalorder %s30, 0
      %p365 = por %p363, %p364
      %p366 = scmp.ne.s32.totalorder %s354, %s355
      %p367 = scmp.eq.s32.totalorder %s31, 3
      %p368 = por %p366, %p367
      %p370 = scmp.ne.s32.totalorder %s355, %s369
      %p371 = scmp.eq.s32.totalorder %s31, 0
      %p372 = por %p370, %p371
      %s374 = sadd.s32 %s373, 1
      %p377 = scmp.eq.s32.totalorder %s25, 3
      %p378 = scmp.ne.s32.totalorder %s373, %s375
      %p379 = scmp.eq.s32.totalorder %s25, 0
      %p380 = por %p378, %p379
      %p381 = scmp.ne.s32.totalorder %s373, %s375
      %p382 = scmp.eq.s32.totalorder %s30, 3
      %p383 = por %p381, %p382
      %p384 = scmp.ne.s32.totalorder %s375, %s376
      %p385 = scmp.eq.s32.totalorder %s30, 0
      %p386 = por %p384, %p385
      %p387 = scmp.ne.s32.totalorder %s375, %s376
      %p388 = scmp.eq.s32.totalorder %s31, 3
      %p389 = por %p387, %p388
      %p391 = scmp.ne.s32.totalorder %s376, %s390
      %p392 = scmp.eq.s32.totalorder %s31, 0
      %p393 = por %p391, %p392
      %s395 = sadd.s32 %s394, 1
      %p398 = scmp.eq.s32.totalorder %s25, 3
      %p399 = scmp.ne.s32.totalorder %s394, %s396
      %p400 = scmp.eq.s32.totalorder %s25, 0
      %p401 = por %p399, %p400
      %p402 = scmp.ne.s32.totalorder %s394, %s396
      %p403 = scmp.eq.s32.totalorder %s30, 3
      %p404 = por %p402, %p403
      %p405 = scmp.ne.s32.totalorder %s396, %s397
      %p406 = scmp.eq.s32.totalorder %s30, 0
      %p407 = por %p405, %p406
      %p408 = scmp.ne.s32.totalorder %s396, %s397
      %p409 = scmp.eq.s32.totalorder %s31, 3
      %p410 = por %p408, %p409
      %p412 = scmp.ne.s32.totalorder %s397, %s411
      %p413 = scmp.eq.s32.totalorder %s31, 0
      %p414 = por %p412, %p413
      %s416 = sadd.s32 %s415, 1
      %p419 = scmp.eq.s32.totalorder %s25, 3
      %p420 = scmp.ne.s32.totalorder %s415, %s417
      %p421 = scmp.eq.s32.totalorder %s25, 0
      %p422 = por %p420, %p421
      %p423 = scmp.ne.s32.totalorder %s415, %s417
      %p424 = scmp.eq.s32.totalorder %s30, 3
      %p425 = por %p423, %p424
      %p426 = scmp.ne.s32.totalorder %s417, %s418
      %p427 = scmp.eq.s32.totalorder %s30, 0
      %p428 = por %p426, %p427
      %p429 = scmp.ne.s32.totalorder %s417, %s418
      %p430 = scmp.eq.s32.totalorder %s31, 3
      %p431 = por %p429, %p430
      %p433 = scmp.ne.s32.totalorder %s418, %s432
      %p434 = scmp.eq.s32.totalorder %s31, 0
      %p435 = por %p433, %p434
      %s436 = ssub.s32 %s32, %s44
      %p437 = scmp.eq.s32.totalorder %s436, 0
      %s439 = sadd.s32 %s438, 1
      %s440 = scalar_select %p437, %s438, %s439
      %p443 = pneg %p437
      %p444 = scmp.eq.s32.totalorder %s25, 3
      %p445 = por %p443, %p444
      %p446 = scmp.ne.s32.totalorder %s438, %s441
      %p447 = scmp.eq.s32.totalorder %s25, 0
      %p448 = por %p446, %p447
      %p449 = scmp.ne.s32.totalorder %s438, %s441
      %p450 = scmp.eq.s32.totalorder %s30, 3
      %p451 = por %p449, %p450
      %p452 = scmp.ne.s32.totalorder %s441, %s442
      %p453 = scmp.eq.s32.totalorder %s30, 0
      %p454 = por %p452, %p453
      %p455 = scmp.ne.s32.totalorder %s441, %s442
      %p456 = scmp.eq.s32.totalorder %s31, 3
      %p457 = por %p455, %p456
      %p459 = scmp.ne.s32.totalorder %s442, %s458
      %p460 = scmp.eq.s32.totalorder %s31, 0
      %p461 = por %p459, %p460
      %p462 = scmp.le.s32.totalorder 1, %s25
      %p463 = scmp.lt.s32.totalorder %s25, 5
      %p464 = pnand %p462, %p463
      %p465 = pneg %p464
      // Predicated region
      $region9: #{midinet_forward.1} parent=5 // pred_check
        _
      $region10: #{midinet_forward.1} parent=5 // pred_check_branch
        %467 = sbr.rel (%p464) target = $region12
      $region11: #{midinet_forward.1} parent=5 // pred_region
        %s468 = ssub.s32 %s25, 1
        // Predicated region
        $region13: #{midinet_forward.1} parent=11 // pred_check
          %p469 = pneg %p344
        $region14: #{midinet_forward.1} parent=11 // pred_check_branch
          %471 = sbr.rel (%p469) target = $region16
        $region15: #{midinet_forward.1} parent=11 // pred_region
          _
        $region16: #{midinet_forward.1} parent=11 // pred_fallthru
          _
        // Predicated region
        $region17: #{midinet_forward.1} parent=11 // pred_check
          %p472 = pneg %p365
        $region18: #{midinet_forward.1} parent=11 // pred_check_branch
          %474 = sbr.rel (%p472) target = $region20
        $region19: #{midinet_forward.1} parent=11 // pred_region
          _
        $region20: #{midinet_forward.1} parent=11 // pred_fallthru
          _
        // Predicated region
        $region21: #{midinet_forward.1} parent=11 // pred_check
          %p475 = pneg %p386
        $region22: #{midinet_forward.1} parent=11 // pred_check_branch
          %477 = sbr.rel (%p475) target = $region24
        $region23: #{midinet_forward.1} parent=11 // pred_region
          _
        $region24: #{midinet_forward.1} parent=11 // pred_fallthru
          _
        // Predicated region
        $region25: #{midinet_forward.1} parent=11 // pred_check
          %p478 = pneg %p407
        $region26: #{midinet_forward.1} parent=11 // pred_check_branch
          %480 = sbr.rel (%p478) target = $region28
        $region27: #{midinet_forward.1} parent=11 // pred_region
          _
        $region28: #{midinet_forward.1} parent=11 // pred_fallthru
          _
        // Predicated region
        $region29: #{midinet_forward.1} parent=11 // pred_check
          %p481 = pneg %p428
        $region30: #{midinet_forward.1} parent=11 // pred_check_branch
          %483 = sbr.rel (%p481) target = $region32
        $region31: #{midinet_forward.1} parent=11 // pred_region
          _
        $region32: #{midinet_forward.1} parent=11 // pred_fallthru
          _
      $region12: #{midinet_forward.1} parent=5 // pred_fallthru
        _
      %p484 = scmp.lt.s32.totalorder %s25, 4
      // Predicated region
      $region33: #{midinet_forward.1} parent=5 // pred_check
        %p485 = pneg %p484
      $region34: #{midinet_forward.1} parent=5 // pred_check_branch
        %487 = sbr.rel (%p485) target = $region36
      $region35: #{midinet_forward.1} parent=5 // pred_region
        // Predicated region
        $region37: #{midinet_forward.1} parent=35 // pred_check
          %p488 = pneg %p57
        $region38: #{midinet_forward.1} parent=35 // pred_check_branch
          %490 = sbr.rel (%p488) target = $region40
        $region39: #{midinet_forward.1} parent=35 // pred_region
          %p491 = scmp.lt.s32.totalorder %s32, 1
          %s492 = scalar_select %p491, %s32, 1
          %s493 = smul.addr %s492, 8
          %s494 = scalar_lea.vmem %s0, %s493
        $region40: #{midinet_forward.1} parent=35 // pred_fallthru
          _
        // Predicated region
        $region41: #{midinet_forward.1} parent=35 // pred_check
          %p495 = pneg %p83
        $region42: #{midinet_forward.1} parent=35 // pred_check_branch
          %497 = sbr.rel (%p495) target = $region44
        $region43: #{midinet_forward.1} parent=35 // pred_region
          %p498 = scmp.lt.s32.totalorder %s33, 1
          %s499 = scalar_select %p498, %s33, 1
          %s500 = scalar_lea.vmem %s1, %s499
        $region44: #{midinet_forward.1} parent=35 // pred_fallthru
          _
        // Predicated region
        $region45: #{midinet_forward.1} parent=35 // pred_check
          %p501 = pneg %p109
        $region46: #{midinet_forward.1} parent=35 // pred_check_branch
          %503 = sbr.rel (%p501) target = $region48
        $region47: #{midinet_forward.1} parent=35 // pred_region
          %p504 = scmp.lt.s32.totalorder %s33, 1
          %s505 = scalar_select %p504, %s33, 1
          %s506 = scalar_lea.vmem %s2, %s505
        $region48: #{midinet_forward.1} parent=35 // pred_fallthru
          _
        // Predicated region
        $region49: #{midinet_forward.1} parent=35 // pred_check
          %p507 = pneg %p135
        $region50: #{midinet_forward.1} parent=35 // pred_check_branch
          %509 = sbr.rel (%p507) target = $region52
        $region51: #{midinet_forward.1} parent=35 // pred_region
          %p510 = scmp.lt.s32.totalorder %s33, 1
          %s511 = scalar_select %p510, %s33, 1
          %s512 = smul.addr %s511, 4
          %s513 = smul.addr %s512, 4
          %s514 = scalar_lea.vmem %s3, %s513
        $region52: #{midinet_forward.1} parent=35 // pred_fallthru
          _
        // Predicated region
        $region53: #{midinet_forward.1} parent=35 // pred_check
          %p515 = pneg %p161
        $region54: #{midinet_forward.1} parent=35 // pred_check_branch
          %517 = sbr.rel (%p515) target = $region56
        $region55: #{midinet_forward.1} parent=35 // pred_region
          %p518 = scmp.lt.s32.totalorder %s33, 1
          %s519 = scalar_select %p518, %s33, 1
          %s520 = scalar_lea.vmem %s4, %s519
        $region56: #{midinet_forward.1} parent=35 // pred_fallthru
          _
        // Predicated region
        $region57: #{midinet_forward.1} parent=35 // pred_check
          %p521 = pneg %p187
        $region58: #{midinet_forward.1} parent=35 // pred_check_branch
          %523 = sbr.rel (%p521) target = $region60
        $region59: #{midinet_forward.1} parent=35 // pred_region
          %p524 = scmp.lt.s32.totalorder %s33, 1
          %s525 = scalar_select %p524, %s33, 1
          %s526 = smul.addr %s525, 4
          %s527 = smul.addr %s526, 4
          %s528 = scalar_lea.vmem %s5, %s527
        $region60: #{midinet_forward.1} parent=35 // pred_fallthru
          _
        // Predicated region
        $region61: #{midinet_forward.1} parent=35 // pred_check
          %p529 = pneg %p213
        $region62: #{midinet_forward.1} parent=35 // pred_check_branch
          %531 = sbr.rel (%p529) target = $region64
        $region63: #{midinet_forward.1} parent=35 // pred_region
          %p532 = scmp.lt.s32.totalorder %s33, 1
          %s533 = scalar_select %p532, %s33, 1
          %s534 = scalar_lea.vmem %s6, %s533
        $region64: #{midinet_forward.1} parent=35 // pred_fallthru
          _
        // Predicated region
        $region65: #{midinet_forward.1} parent=35 // pred_check
          %p535 = pneg %p239
        $region66: #{midinet_forward.1} parent=35 // pred_check_branch
          %537 = sbr.rel (%p535) target = $region68
        $region67: #{midinet_forward.1} parent=35 // pred_region
          %p538 = scmp.lt.s32.totalorder %s33, 1
          %s539 = scalar_select %p538, %s33, 1
          %s540 = smul.addr %s539, 4
          %s541 = smul.addr %s540, 4
          %s542 = scalar_lea.vmem %s7, %s541
        $region68: #{midinet_forward.1} parent=35 // pred_fallthru
          _
        // Predicated region
        $region69: #{midinet_forward.1} parent=35 // pred_check
          %p543 = pneg %p265
        $region70: #{midinet_forward.1} parent=35 // pred_check_branch
          %545 = sbr.rel (%p543) target = $region72
        $region71: #{midinet_forward.1} parent=35 // pred_region
          %p546 = scmp.lt.s32.totalorder %s33, 1
          %s547 = scalar_select %p546, %s33, 1
          %s548 = scalar_lea.vmem %s8, %s547
        $region72: #{midinet_forward.1} parent=35 // pred_fallthru
          _
        // Predicated region
        $region73: #{midinet_forward.1} parent=35 // pred_check
          %p549 = pneg %p291
        $region74: #{midinet_forward.1} parent=35 // pred_check_branch
          %551 = sbr.rel (%p549) target = $region76
        $region75: #{midinet_forward.1} parent=35 // pred_region
          %p552 = scmp.lt.s32.totalorder %s33, 1
          %s553 = scalar_select %p552, %s33, 1
          %s554 = smul.addr %s553, 8
          %s555 = smul.addr %s554, 4
          %s556 = scalar_lea.vmem %s9, %s555
        $region76: #{midinet_forward.1} parent=35 // pred_fallthru
          _
        // Predicated region
        $region77: #{midinet_forward.1} parent=35 // pred_check
          %p557 = pneg %p317
        $region78: #{midinet_forward.1} parent=35 // pred_check_branch
          %559 = sbr.rel (%p557) target = $region80
        $region79: #{midinet_forward.1} parent=35 // pred_region
          %p560 = scmp.lt.s32.totalorder %s33, 1
          %s561 = scalar_select %p560, %s33, 1
          %s562 = scalar_lea.vmem %s10, %s561
        $region80: #{midinet_forward.1} parent=35 // pred_fallthru
          _
      $region36: #{midinet_forward.1} parent=5 // pred_fallthru
        _
      %p563 = scmp.le.s32.totalorder 1, %s25
      %p564 = scmp.lt.s32.totalorder %s25, 5
      %p565 = pnand %p563, %p564
      %p566 = pneg %p565
      // Predicated region
      $region81: #{midinet_forward.1} parent=5 // pred_check
        _
      $region82: #{midinet_forward.1} parent=5 // pred_check_branch
        %568 = sbr.rel (%p565) target = $region84
      $region83: #{midinet_forward.1} parent=5 // pred_region
        %s569 = ssub.s32 %s25, 1
        %p570 = scmp.lt.s32.totalorder %s34, 1
        %s571 = scalar_select %p570, %s34, 1
        %s572 = smul.addr %s571, 8
        %s573 = scalar_lea.vmem %s0, %s572
        %p574 = pneg %p63
        %p575 = pneg %p60
        %p576 = scmp.lt.s32.totalorder %s35, 1
        %s577 = scalar_select %p576, %s35, 1
        %s578 = scalar_lea.vmem %s1, %s577
        %p579 = pneg %p89
        %p580 = pneg %p86
        %p581 = scmp.lt.s32.totalorder %s35, 1
        %s582 = scalar_select %p581, %s35, 1
        %s583 = scalar_lea.vmem %s2, %s582
        %p584 = pneg %p115
        %p585 = pneg %p112
        %p586 = scmp.lt.s32.totalorder %s35, 1
        %s587 = scalar_select %p586, %s35, 1
        %s588 = smul.addr %s587, 4
        %s589 = smul.addr %s588, 4
        %s590 = scalar_lea.vmem %s3, %s589
        %p591 = pneg %p141
        %p592 = pneg %p138
        %p593 = scmp.lt.s32.totalorder %s35, 1
        %s594 = scalar_select %p593, %s35, 1
        %s595 = scalar_lea.vmem %s4, %s594
        %p596 = pneg %p167
        %p597 = pneg %p164
        %p598 = scmp.lt.s32.totalorder %s35, 1
        %s599 = scalar_select %p598, %s35, 1
        %s600 = smul.addr %s599, 4
        %s601 = smul.addr %s600, 4
        %s602 = scalar_lea.vmem %s5, %s601
        %p603 = pneg %p193
        %p604 = pneg %p190
        %p605 = scmp.lt.s32.totalorder %s35, 1
        %s606 = scalar_select %p605, %s35, 1
        %s607 = scalar_lea.vmem %s6, %s606
        %p608 = pneg %p219
        %p609 = pneg %p216
        %p610 = scmp.lt.s32.totalorder %s35, 1
        %s611 = scalar_select %p610, %s35, 1
        %s612 = smul.addr %s611, 4
        %s613 = smul.addr %s612, 4
        %s614 = scalar_lea.vmem %s7, %s613
        %p615 = pneg %p245
        %p616 = pneg %p242
        %p617 = scmp.lt.s32.totalorder %s35, 1
        %s618 = scalar_select %p617, %s35, 1
        %s619 = scalar_lea.vmem %s8, %s618
        %p620 = pneg %p271
        %p621 = pneg %p268
        %p622 = scmp.lt.s32.totalorder %s35, 1
        %s623 = scalar_select %p622, %s35, 1
        %s624 = smul.addr %s623, 8
        %s625 = smul.addr %s624, 4
        %s626 = scalar_lea.vmem %s9, %s625
        %p627 = pneg %p297
        %p628 = pneg %p294
        %p629 = scmp.lt.s32.totalorder %s35, 1
        %s630 = scalar_select %p629, %s35, 1
        %s631 = scalar_lea.vmem %s10, %s630
        %p632 = pneg %p323
        %p633 = pneg %p320
        %p634 = pneg %p344
        %p635 = pneg %p341
        %p636 = pneg %p365
        %p637 = pneg %p362
        %p638 = pneg %p386
        %p639 = pneg %p383
        %p640 = pneg %p407
        %p641 = pneg %p404
        %p642 = pneg %p428
        %p643 = pneg %p425
        %p644 = pneg %p454
        %p645 = pneg %p451
        %s646 = sand.u32 %s441, 1
        %s647 = scalar_lea.sflag [#allocation4], %s646
        %s648 = sand.u32 %s441, 1
        %s649 = smul.addr %s648, 8
        %s650 = scalar_lea.vmem [#allocation3], %s649
        %p651 = scmp.lt.s32.totalorder %s34, 1
        %s652 = scalar_select %p651, %s34, 1
        %s653 = smul.addr %s652, 8
        %s654 = scalar_lea.vmem %s0, %s653
        %p655 = scmp.lt.s32.totalorder %s35, 1
        %s656 = scalar_select %p655, %s35, 1
        %s657 = scalar_lea.vmem %s1, %s656
        %p658 = scmp.lt.s32.totalorder %s35, 1
        %s659 = scalar_select %p658, %s35, 1
        %s660 = scalar_lea.vmem %s2, %s659
        %p661 = scmp.lt.s32.totalorder %s35, 1
        %s662 = scalar_select %p661, %s35, 1
        %s663 = smul.addr %s662, 4
        %s664 = smul.addr %s663, 4
        %s665 = scalar_lea.vmem %s3, %s664
        %p666 = scmp.lt.s32.totalorder %s35, 1
        %s667 = scalar_select %p666, %s35, 1
        %s668 = scalar_lea.vmem %s4, %s667
        %p669 = scmp.lt.s32.totalorder %s35, 1
        %s670 = scalar_select %p669, %s35, 1
        %s671 = smul.addr %s670, 4
        %s672 = smul.addr %s671, 4
        %s673 = scalar_lea.vmem %s5, %s672
        %p674 = scmp.lt.s32.totalorder %s35, 1
        %s675 = scalar_select %p674, %s35, 1
        %s676 = scalar_lea.vmem %s6, %s675
        %p677 = scmp.lt.s32.totalorder %s35, 1
        %s678 = scalar_select %p677, %s35, 1
        %s679 = smul.addr %s678, 4
        %s680 = smul.addr %s679, 4
        %s681 = scalar_lea.vmem %s7, %s680
        %p682 = scmp.lt.s32.totalorder %s35, 1
        %s683 = scalar_select %p682, %s35, 1
        %s684 = scalar_lea.vmem %s8, %s683
        %p685 = scmp.lt.s32.totalorder %s35, 1
        %s686 = scalar_select %p685, %s35, 1
        %s687 = smul.addr %s686, 8
        %s688 = smul.addr %s687, 4
        %s689 = scalar_lea.vmem %s9, %s688
        %p690 = scmp.lt.s32.totalorder %s35, 1
        %s691 = scalar_select %p690, %s35, 1
        %s692 = scalar_lea.vmem %s10, %s691
        %p694 = scmp.eq.s32.totalorder %s35, 0
        // Predicated region
        $region85: #{midinet_forward.1} parent=83 // pred_check
          %p695 = pneg %p694
        $region86: #{midinet_forward.1} parent=83 // pred_check_branch
          %697 = sbr.rel (%p695) target = $region88
        $region87: #{midinet_forward.1} parent=83 // pred_region
          %v698 = vld [vmem:[%s654] sm:$0xff]
          %vm699 = vcmask 261120
          %700 = vst.msk [vmem:[#allocation2] sm:$0xff] %vm699, %v698
        $region88: #{midinet_forward.1} parent=83 // pred_fallthru
          _
        %v701 = vld [vmem:[#allocation2] sm:$0xff]
        %v702 = vld [vmem:[%s657] sm:$0x1]
        %v703 = vmul.f32 %v701, %v701
        %vm704 = vcmask 261120
        %v705 = vsel %vm704, %v703, 0.0
        %706 = vadd.xlane.f32.xlu0 %v705
        %v707 = vpop.xlane.xlu0 %706
        %v709 = vlaneseq
        %v710 = vshrl.u32 %v709, 7
        %v711 = vsub.s32 0, %v710
        %v712 = vrot.slane %v702, %v711
        %713 = vset.pattern.permute.xlu0 0
        %714 = vperm.xlu0 %713, %v712
        %v715 = vpop.permute.xlu0 %714
        %v717 = vmul.f32 %v715, %v701
        %v718 = vmax.f32 %v707, 1e-10
        %v719 = vrsqrt.pop %v718
        %v720 = vmul.f32 %v717, %v719
        %v721 = vpack.c.bf16 %v720, %v720
        %v722 = vld [vmem:[%s665] sm:$0xf]
        %v723 = vld [vmem:[%s665 + $0x4] sm:$0xf]
        %v724 = vld [vmem:[%s665 + $0x8] sm:$0xf]
        %v725 = vld [vmem:[%s665 + $0xc] sm:$0xf]
        %v726 = vld [vmem:[%s668] sm:$0x1]
        %v728 = vlaneseq
        %v729 = vshrl.u32 %v728, 7
        %v730 = vsub.s32 0, %v729
        %v731 = vrot.slane %v726, %v730
        %v737 = vunpack.c.l.b16 %v722
        %v738 = vunpack.c.l.b16 %v723
        %v739 = vunpack.c.l.b16 %v724
        %v740 = vunpack.c.l.b16 %v725
        %v741 = vpack.c.b16 %v738, %v737
        %v742 = vpack.c.b16 %v740, %v739
        %v746 = vsel %vm704, %v721, 0
        %748 = vmatprep.subr.bf16.mxu0 0
        %749 = vmatpush1.bf16.msra.mxu0 %v741
        %750 = vmatprep.subr.bf16.mxu0 0
        %751 = vmatpush1.bf16.msra.mxu0 %v742
        %752 = vmatprep.subr.bf16.mxu0 0
        %753 = vmatpush1.bf16.msra.mxu0 0
        %754 = vmatprep.subr.bf16.mxu0 0
        %755 = vmatpush1.bf16.msra.mxu0 0
        %756 = vmatprep.subr.bf16.mxu0 0
        %757 = vmatpush1.bf16.msra.mxu0 0
        %758 = vmatprep.subr.bf16.mxu0 0
        %759 = vmatpush1.bf16.msra.mxu0 0
        %760 = vmatprep.subr.bf16.mxu0 0
        %761 = vmatpush1.bf16.msra.mxu0 0
        %762 = vmatprep.subr.bf16.mxu0 0
        %763 = vmatpush1.bf16.msra.mxu0 0
        %764 = vmatprep.subr.bf16.mxu0 0
        %765 = vmatpush1.bf16.msra.mxu0 0
        %766 = vmatprep.subr.bf16.mxu0 0
        %767 = vmatpush1.bf16.msra.mxu0 0
        %768 = vmatprep.subr.bf16.mxu0 0
        %769 = vmatpush1.bf16.msra.mxu0 0
        %770 = vmatprep.subr.bf16.mxu0 0
        %771 = vmatpush1.bf16.msra.mxu0 0
        %772 = vmatprep.subr.bf16.mxu0 0
        %773 = vmatpush1.bf16.msra.mxu0 0
        %774 = vmatprep.subr.bf16.mxu0 0
        %775 = vmatpush1.bf16.msra.mxu0 0
        %776 = vmatprep.subr.bf16.mxu0 0
        %777 = vmatpush1.bf16.msra.mxu0 0
        %778 = vmatprep.subr.bf16.mxu0 0
        %779 = vmatpush1.bf16.msra.mxu0 0
        %780 = vmatprep.mubr.bf16.mxu0 0
        %781 = vmatmul.mubr.bf16.gmra.mrb[0].mxu0 %v746
        %v782 = vpop.f32.mrb[0].mxu0
        %v783 = vadd.f32 %v731, %v782
        %v784 = vpop.f32.mrb[0].mxu0
        %v785 = vpop.f32.mrb[0].mxu0
        %v786 = vpop.f32.mrb[0].mxu0
        %787 = vdwg.mxu0
        %v788 = vmul.f32 %v783, 0.35355338
        %v789 = vpack.c.bf16 %v788, %v788
        %v790 = vld [vmem:[%s11] sm:$0xff]
        %v791 = vld [vmem:[%s11 + $0x8] sm:$0xff]
        %v792 = vld [vmem:[%s11 + $0x10] sm:$0xff]
        %v793 = vld [vmem:[%s11 + $0x18] sm:$0xff]
        %795 = vrot.lane.b32.xlu0 %v783, 96
        %v796 = vpop.permute.xlu0 %795
        %798 = vrot.lane.b32.xlu0 %v783, 104
        %v799 = vpop.permute.xlu0 %798
        %801 = vrot.lane.b32.xlu0 %v783, 112
        %v802 = vpop.permute.xlu0 %801
        %804 = vrot.lane.b32.xlu0 %v783, 120
        %v805 = vpop.permute.xlu0 %804
        %vm807 = vcmask 64512
        %v808 = vsel %vm807, %v796, %v799
        %vm809 = vcmask 130048
        %v810 = vsel %vm809, %v808, %v802
        %vm811 = vcmask 195584
        %v812 = vsel %vm811, %v810, %v805
        %v813 = vmul.f32 %v812, %v790
        %v814 = vmul.f32 %v812, %v791
        %v815 = vmul.f32 %v812, %v792
        %v816 = vmul.f32 %v812, %v793
        %v817 = vpack.c.bf16 %v814, %v813
        %v818 = vpack.c.bf16 %v816, %v815
        %819 = vrot.lane.b32.xlu0 %v783, 88
        %v820 = vpop.permute.xlu0 %819
        %v822 = vsel %vm807, %v820, %v796
        %v823 = vsel %vm809, %v822, %v799
        %v824 = vsel %vm811, %v823, %v802
        %v825 = vmul.f32 %v824, %v790
        %v826 = vmul.f32 %v824, %v791
        %v827 = vmul.f32 %v824, %v792
        %v828 = vmul.f32 %v824, %v793
        %v829 = vpack.c.bf16 %v826, %v825
        %v830 = vpack.c.bf16 %v828, %v827
        %v831 = vld [vmem:[%s13] sm:$0xff]
        %v833 = vsel %vm704, %v789, 0
        %v836 = vsel %vm704, %v817, 0
        %v839 = vsel %vm704, %v818, 0
        %841 = vmatprep.subr.bf16.mxu0 0
        %842 = vmatpush1.bf16.xpose.msra.mxu0 %v836
        %843 = vmatprep.subr.bf16.mxu0 0
        %844 = vmatpush1.bf16.xpose.msra.mxu0 %v839
        %845 = vmatprep.subr.bf16.mxu0 0
        %846 = vmatpush1.bf16.xpose.msra.mxu0 0
        %847 = vmatprep.subr.bf16.mxu0 0
        %848 = vmatpush1.bf16.xpose.msra.mxu0 0
        %849 = vmatprep.subr.bf16.mxu0 0
        %850 = vmatpush1.bf16.xpose.msra.mxu0 0
        %851 = vmatprep.subr.bf16.mxu0 0
        %852 = vmatpush1.bf16.xpose.msra.mxu0 0
        %853 = vmatprep.subr.bf16.mxu0 0
        %854 = vmatpush1.bf16.xpose.msra.mxu0 0
        %855 = vmatprep.subr.bf16.mxu0 0
        %856 = vmatpush1.bf16.xpose.msra.mxu0 0
        %857 = vmatprep.subr.bf16.mxu0 0
        %858 = vmatpush1.bf16.xpose.msra.mxu0 0
        %859 = vmatprep.subr.bf16.mxu0 0
        %860 = vmatpush1.bf16.xpose.msra.mxu0 0
        %861 = vmatprep.subr.bf16.mxu0 0
        %862 = vmatpush1.bf16.xpose.msra.mxu0 0
        %863 = vmatprep.subr.bf16.mxu0 0
        %864 = vmatpush1.bf16.xpose.msra.mxu0 0
        %865 = vmatprep.subr.bf16.mxu0 0
        %866 = vmatpush1.bf16.xpose.msra.mxu0 0
        %867 = vmatprep.subr.bf16.mxu0 0
        %868 = vmatpush1.bf16.xpose.msra.mxu0 0
        %869 = vmatprep.subr.bf16.mxu0 0
        %870 = vmatpush1.bf16.xpose.msra.mxu0 0
        %871 = vmatprep.subr.bf16.mxu0 0
        %872 = vmatpush1.bf16.xpose.msra.mxu0 0
        %873 = vmatprep.mubr.bf16.mxu0 0
        %874 = vmatmul.mubr.bf16.gmra.mrb[0].mxu0 %v833
        %v875 = vpop.f32.mrb[0].mxu0
        %v876 = vadd.f32 %v831, %v875
        %v877 = vpop.f32.mrb[0].mxu0
        %v878 = vpop.f32.mrb[0].mxu0
        %v879 = vpop.f32.mrb[0].mxu0
        %880 = vdwg.mxu0
        %v881 = vsel %vm704, %v876, -inf
        %882 = vmax.xlane.f32.xlu0 %v881
        %v883 = vpop.xlane.xlu0 %882
        %v884 = vsub.f32 %v876, %v883
        %v885 = vmul.f32 %v884, 1.442695
        %v886 = vpow.pop %v885
        %v887 = vld [vmem:[%s12] sm:$0xff]
        %v888 = vld [vmem:[%s12 + $0x8] sm:$0xff]
        %v889 = vld [vmem:[%s12 + $0x10] sm:$0xff]
        %v890 = vld [vmem:[%s12 + $0x18] sm:$0xff]
        %v892 = vsel %vm704, %v886, 0
        %894 = vmatprep.subr.mxu0 0.0
        %895 = vmatpush1.msra.mxu0 %v887
        %896 = vmatprep.subr.mxu0 0.0
        %897 = vmatpush1.msra.mxu0 %v888
        %898 = vmatprep.subr.mxu0 0.0
        %899 = vmatpush1.msra.mxu0 %v889
        %900 = vmatprep.subr.mxu0 0.0
        %901 = vmatpush1.msra.mxu0 %v890
        %902 = vmatprep.subr.mxu0 0.0
        %903 = vmatpush1.msra.mxu0 0.0
        %904 = vmatprep.subr.mxu0 0.0
        %905 = vmatpush1.msra.mxu0 0.0
        %906 = vmatprep.subr.mxu0 0.0
        %907 = vmatpush1.msra.mxu0 0.0
        %908 = vmatprep.subr.mxu0 0.0
        %909 = vmatpush1.msra.mxu0 0.0
        %910 = vmatprep.subr.mxu0 0.0
        %911 = vmatpush1.msra.mxu0 0.0
        %912 = vmatprep.subr.mxu0 0.0
        %913 = vmatpush1.msra.mxu0 0.0
        %914 = vmatprep.subr.mxu0 0.0
        %915 = vmatpush1.msra.mxu0 0.0
        %916 = vmatprep.subr.mxu0 0.0
        %917 = vmatpush1.msra.mxu0 0.0
        %918 = vmatprep.subr.mxu0 0.0
        %919 = vmatpush1.msra.mxu0 0.0
        %920 = vmatprep.subr.mxu0 0.0
        %921 = vmatpush1.msra.mxu0 0.0
        %922 = vmatprep.subr.mxu0 0.0
        %923 = vmatpush1.msra.mxu0 0.0
        %924 = vmatprep.subr.mxu0 0.0
        %925 = vmatpush1.msra.mxu0 0.0
        %926 = vmatprep.subr.mxu0 0.0
        %927 = vmatpush1.msra.mxu0 0.0
        %928 = vmatprep.subr.mxu0 0.0
        %929 = vmatpush1.msra.mxu0 0.0
        %930 = vmatprep.subr.mxu0 0.0
        %931 = vmatpush1.msra.mxu0 0.0
        %932 = vmatprep.subr.mxu0 0.0
        %933 = vmatpush1.msra.mxu0 0.0
        %934 = vmatprep.subr.mxu0 0.0
        %935 = vmatpush1.msra.mxu0 0.0
        %936 = vmatprep.subr.mxu0 0.0
        %937 = vmatpush1.msra.mxu0 0.0
        %938 = vmatprep.subr.mxu0 0.0
        %939 = vmatpush1.msra.mxu0 0.0
        %940 = vmatprep.subr.mxu0 0.0
        %941 = vmatpush1.msra.mxu0 0.0
        %942 = vmatprep.subr.mxu0 0.0
        %943 = vmatpush1.msra.mxu0 0.0
        %944 = vmatprep.subr.mxu0 0.0
        %945 = vmatpush1.msra.mxu0 0.0
        %946 = vmatprep.subr.mxu0 0.0
        %947 = vmatpush1.msra.mxu0 0.0
        %948 = vmatprep.subr.mxu0 0.0
        %949 = vmatpush1.msra.mxu0 0.0
        %950 = vmatprep.subr.mxu0 0.0
        %951 = vmatpush1.msra.mxu0 0.0
        %952 = vmatprep.subr.mxu0 0.0
        %953 = vmatpush1.msra.mxu0 0.0
        %954 = vmatprep.subr.mxu0 0.0
        %955 = vmatpush1.msra.mxu0 0.0
        %956 = vmatprep.subr.mxu0 0.0
        %957 = vmatpush1.msra.mxu0 0.0
        %958 = vmatprep.mubr.f32.mxu0 0.0
        %959 = vmatmul.mubr.f32.gmra.mrb[0].mxu0 %v892
        %v960 = vpop.f32.mrb[0].mxu0
        %v961 = vadd.f32 0.0, %v960
        %v962 = vpop.f32.mrb[0].mxu0
        %963 = vdwg.mxu0
        %v964 = vmax.f32 %v961, 1e-30
        %v965 = vrcp.pop %v964
        %v966 = vmul.f32 %v886, %v965
        %v967 = vpack.c.bf16 %v966, %v966
        %v969 = vsel %vm704, %v967, 0
        %971 = vmatprep.subr.bf16.mxu0 0
        %972 = vmatpush1.bf16.msra.mxu0 %v829
        %973 = vmatprep.subr.bf16.mxu0 0
        %974 = vmatpush1.bf16.msra.mxu0 %v830
        %975 = vmatprep.subr.bf16.mxu0 0
        %976 = vmatpush1.bf16.msra.mxu0 0
        %977 = vmatprep.subr.bf16.mxu0 0
        %978 = vmatpush1.bf16.msra.mxu0 0
        %979 = vmatprep.subr.bf16.mxu0 0
        %980 = vmatpush1.bf16.msra.mxu0 0
        %981 = vmatprep.subr.bf16.mxu0 0
        %982 = vmatpush1.bf16.msra.mxu0 0
        %983 = vmatprep.subr.bf16.mxu0 0
        %984 = vmatpush1.bf16.msra.mxu0 0
        %985 = vmatprep.subr.bf16.mxu0 0
        %986 = vmatpush1.bf16.msra.mxu0 0
        %987 = vmatprep.subr.bf16.mxu0 0
        %988 = vmatpush1.bf16.msra.mxu0 0
        %989 = vmatprep.subr.bf16.mxu0 0
        %990 = vmatpush1.bf16.msra.mxu0 0
        %991 = vmatprep.subr.bf16.mxu0 0
        %992 = vmatpush1.bf16.msra.mxu0 0
        %993 = vmatprep.subr.bf16.mxu0 0
        %994 = vmatpush1.bf16.msra.mxu0 0
        %995 = vmatprep.subr.bf16.mxu0 0
        %996 = vmatpush1.bf16.msra.mxu0 0
        %997 = vmatprep.subr.bf16.mxu0 0
        %998 = vmatpush1.bf16.msra.mxu0 0
        %999 = vmatprep.subr.bf16.mxu0 0
        %1000 = vmatpush1.bf16.msra.mxu0 0
        %1001 = vmatprep.subr.bf16.mxu0 0
        %1002 = vmatpush1.bf16.msra.mxu0 0
        %1003 = vmatprep.mubr.bf16.mxu0 0
        %1004 = vmatmul.mubr.bf16.gmra.mrb[0].mxu0 %v969
        %v1005 = vpop.f32.mrb[0].mxu0
        %v1006 = vadd.f32 0.0, %v1005
        %v1007 = vpop.f32.mrb[0].mxu0
        %v1008 = vpop.f32.mrb[0].mxu0
        %v1009 = vpop.f32.mrb[0].mxu0
        %1010 = vdwg.mxu0
        %v1011 = vpack.c.bf16 %v1006, %v1006
        %v1012 = vld [vmem:[%s673] sm:$0xf]
        %v1013 = vld [vmem:[%s673 + $0x4] sm:$0xf]
        %v1014 = vld [vmem:[%s673 + $0x8] sm:$0xf]
        %v1015 = vld [vmem:[%s673 + $0xc] sm:$0xf]
        %v1016 = vld [vmem:[%s676] sm:$0x1]
        %v1018 = vlaneseq
        %v1019 = vshrl.u32 %v1018, 7
        %v1020 = vsub.s32 0, %v1019
        %v1021 = vrot.slane %v1016, %v1020
        %v1027 = vunpack.c.l.b16 %v1012
        %v1028 = vunpack.c.l.b16 %v1013
        %v1029 = vunpack.c.l.b16 %v1014
        %v1030 = vunpack.c.l.b16 %v1015
        %v1031 = vpack.c.b16 %v1028, %v1027
        %v1032 = vpack.c.b16 %v1030, %v1029
        %v1036 = vsel %vm704, %v1011, 0
        %1038 = vmatprep.subr.bf16.mxu0 0
        %1039 = vmatpush1.bf16.msra.mxu0 %v1031
        %1040 = vmatprep.subr.bf16.mxu0 0
        %1041 = vmatpush1.bf16.msra.mxu0 %v1032
        %1042 = vmatprep.subr.bf16.mxu0 0
        %1043 = vmatpush1.bf16.msra.mxu0 0
        %1044 = vmatprep.subr.bf16.mxu0 0
        %1045 = vmatpush1.bf16.msra.mxu0 0
        %1046 = vmatprep.subr.bf16.mxu0 0
        %1047 = vmatpush1.bf16.msra.mxu0 0
        %1048 = vmatprep.subr.bf16.mxu0 0
        %1049 = vmatpush1.bf16.msra.mxu0 0
        %1050 = vmatprep.subr.bf16.mxu0 0
        %1051 = vmatpush1.bf16.msra.mxu0 0
        %1052 = vmatprep.subr.bf16.mxu0 0
        %1053 = vmatpush1.bf16.msra.mxu0 0
        %1054 = vmatprep.subr.bf16.mxu0 0
        %1055 = vmatpush1.bf16.msra.mxu0 0
        %1056 = vmatprep.subr.bf16.mxu0 0
        %1057 = vmatpush1.bf16.msra.mxu0 0
        %1058 = vmatprep.subr.bf16.mxu0 0
        %1059 = vmatpush1.bf16.msra.mxu0 0
        %1060 = vmatprep.subr.bf16.mxu0 0
        %1061 = vmatpush1.bf16.msra.mxu0 0
        %1062 = vmatprep.subr.bf16.mxu0 0
        %1063 = vmatpush1.bf16.msra.mxu0 0
        %1064 = vmatprep.subr.bf16.mxu0 0
        %1065 = vmatpush1.bf16.msra.mxu0 0
        %1066 = vmatprep.subr.bf16.mxu0 0
        %1067 = vmatpush1.bf16.msra.mxu0 0
        %1068 = vmatprep.subr.bf16.mxu0 0
        %1069 = vmatpush1.bf16.msra.mxu0 0
        %1070 = vmatprep.mubr.bf16.mxu0 0
        %1071 = vmatmul.mubr.bf16.gmra.mrb[0].mxu0 %v1036
        %v1072 = vpop.f32.mrb[0].mxu0
        %v1073 = vadd.f32 %v1021, %v1072
        %v1074 = vpop.f32.mrb[0].mxu0
        %v1075 = vpop.f32.mrb[0].mxu0
        %v1076 = vpop.f32.mrb[0].mxu0
        %1077 = vdwg.mxu0
        %v1078 = vadd.f32 %v701, %v1073
        %v1079 = vld [vmem:[%s660] sm:$0x1]
        %v1080 = vmul.f32 %v1078, %v1078
        %v1081 = vsel %vm704, %v1080, 0.0
        %1082 = vadd.xlane.f32.xlu0 %v1081
        %v1083 = vpop.xlane.xlu0 %1082
        %v1085 = vlaneseq
        %v1086 = vshrl.u32 %v1085, 7
        %v1087 = vsub.s32 0, %v1086
        %v1088 = vrot.slane %v1079, %v1087
        %1089 = vset.pattern.permute.xlu0 0
        %1090 = vperm.xlu0 %1089, %v1088
        %v1091 = vpop.permute.xlu0 %1090
        %v1093 = vmul.f32 %v1091, %v1078
        %v1094 = vmax.f32 %v1083, 1e-10
        %v1095 = vrsqrt.pop %v1094
        %v1096 = vmul.f32 %v1093, %v1095
        %v1097 = vpack.c.bf16 %v1096, %v1096
        %v1098 = vld [vmem:[%s681] sm:$0xf]
        %v1099 = vld [vmem:[%s681 + $0x4] sm:$0xf]
        %v1100 = vld [vmem:[%s681 + $0x8] sm:$0xf]
        %v1101 = vld [vmem:[%s681 + $0xc] sm:$0xf]
        %v1102 = vld [vmem:[%s684] sm:$0x1]
        %v1104 = vlaneseq
        %v1105 = vshrl.u32 %v1104, 7
        %v1106 = vsub.s32 0, %v1105
        %v1107 = vrot.slane %v1102, %v1106
        %v1113 = vunpack.c.l.b16 %v1098
        %v1114 = vunpack.c.l.b16 %v1099
        %v1115 = vunpack.c.l.b16 %v1100
        %v1116 = vunpack.c.l.b16 %v1101
        %v1117 = vpack.c.b16 %v1114, %v1113
        %v1118 = vpack.c.b16 %v1116, %v1115
        %v1122 = vsel %vm704, %v1097, 0
        %1124 = vmatprep.subr.bf16.mxu0 0
        %1125 = vmatpush1.bf16.msra.mxu0 %v1117
        %1126 = vmatprep.subr.bf16.mxu0 0
        %1127 = vmatpush1.bf16.msra.mxu0 %v1118
        %1128 = vmatprep.subr.bf16.mxu0 0
        %1129 = vmatpush1.bf16.msra.mxu0 0
        %1130 = vmatprep.subr.bf16.mxu0 0
        %1131 = vmatpush1.bf16.msra.mxu0 0
        %1132 = vmatprep.subr.bf16.mxu0 0
        %1133 = vmatpush1.bf16.msra.mxu0 0
        %1134 = vmatprep.subr.bf16.mxu0 0
        %1135 = vmatpush1.bf16.msra.mxu0 0
        %1136 = vmatprep.subr.bf16.mxu0 0
        %1137 = vmatpush1.bf16.msra.mxu0 0
        %1138 = vmatprep.subr.bf16.mxu0 0
        %1139 = vmatpush1.bf16.msra.mxu0 0
        %1140 = vmatprep.subr.bf16.mxu0 0
        %1141 = vmatpush1.bf16.msra.mxu0 0
        %1142 = vmatprep.subr.bf16.mxu0 0
        %1143 = vmatpush1.bf16.msra.mxu0 0
        %1144 = vmatprep.subr.bf16.mxu0 0
        %1145 = vmatpush1.bf16.msra.mxu0 0
        %1146 = vmatprep.subr.bf16.mxu0 0
        %1147 = vmatpush1.bf16.msra.mxu0 0
        %1148 = vmatprep.subr.bf16.mxu0 0
        %1149 = vmatpush1.bf16.msra.mxu0 0
        %1150 = vmatprep.subr.bf16.mxu0 0
        %1151 = vmatpush1.bf16.msra.mxu0 0
        %1152 = vmatprep.subr.bf16.mxu0 0
        %1153 = vmatpush1.bf16.msra.mxu0 0
        %1154 = vmatprep.subr.bf16.mxu0 0
        %1155 = vmatpush1.bf16.msra.mxu0 0
        %1156 = vmatprep.mubr.bf16.mxu0 0
        %1157 = vmatmul.mubr.bf16.gmra.mrb[0].mxu0 %v1122
        %v1158 = vpop.f32.mrb[0].mxu0
        %v1159 = vadd.f32 %v1107, %v1158
        %v1160 = vpop.f32.mrb[0].mxu0
        %v1161 = vpop.f32.mrb[0].mxu0
        %v1162 = vpop.f32.mrb[0].mxu0
        %1163 = vdwg.mxu0
        %v1164 = vmul.f32 %v1159, 0.5
        %v1165 = vmul.f32 %v1159, 0.044715
        %v1166 = vmul.f32 %v1165, %v1159
        %v1167 = vmul.f32 %v1166, %v1159
        %v1168 = vadd.f32 %v1159, %v1167
        %v1169 = vmul.f32 %v1168, 0.7978846
        %v1170 = vtanh.pop %v1169
        %v1171 = vadd.f32 %v1170, 1.0
        %v1172 = vmul.f32 %v1164, %v1171
        %v1173 = vpack.c.bf16 %v1172, %v1172
        %v1174 = vld [vmem:[%s689] sm:$0xf]
        %v1175 = vld [vmem:[%s689 + $0x4] sm:$0xf]
        %v1176 = vld [vmem:[%s689 + $0x8] sm:$0xf]
        %v1177 = vld [vmem:[%s689 + $0xc] sm:$0xf]
        %v1178 = vld [vmem:[%s689 + $0x10] sm:$0xf]
        %v1179 = vld [vmem:[%s689 + $0x14] sm:$0xf]
        %v1180 = vld [vmem:[%s689 + $0x18] sm:$0xf]
        %v1181 = vld [vmem:[%s689 + $0x1c] sm:$0xf]
        %v1182 = vld [vmem:[%s692] sm:$0x1]
        %v1184 = vlaneseq
        %v1185 = vshrl.u32 %v1184, 7
        %v1186 = vsub.s32 0, %v1185
        %v1187 = vrot.slane %v1182, %v1186
        %v1197 = vunpack.c.l.b16 %v1174
        %v1198 = vunpack.c.l.b16 %v1175
        %v1199 = vunpack.c.l.b16 %v1176
        %v1200 = vunpack.c.l.b16 %v1177
        %v1201 = vunpack.c.l.b16 %v1178
        %v1202 = vunpack.c.l.b16 %v1179
        %v1203 = vunpack.c.l.b16 %v1180
        %v1204 = vunpack.c.l.b16 %v1181
        %v1205 = vpack.c.b16 %v1198, %v1197
        %v1206 = vpack.c.b16 %v1200, %v1199
        %v1207 = vpack.c.b16 %v1202, %v1201
        %v1208 = vpack.c.b16 %v1204, %v1203
        %vm1213 = vcmask 523264
        %v1215 = vsel %vm1213, %v1173, 0
        %1217 = vmatprep.subr.bf16.mxu0 0
        %1218 = vmatpush1.bf16.msra.mxu0 %v1205
        %1219 = vmatprep.subr.bf16.mxu0 0
        %1220 = vmatpush1.bf16.msra.mxu0 %v1206
        %1221 = vmatprep.subr.bf16.mxu0 0
        %1222 = vmatpush1.bf16.msra.mxu0 %v1207
        %1223 = vmatprep.subr.bf16.mxu0 0
        %1224 = vmatpush1.bf16.msra.mxu0 %v1208
        %1225 = vmatprep.subr.bf16.mxu0 0
        %1226 = vmatpush1.bf16.msra.mxu0 0
        %1227 = vmatprep.subr.bf16.mxu0 0
        %1228 = vmatpush1.bf16.msra.mxu0 0
        %1229 = vmatprep.subr.bf16.mxu0 0
        %1230 = vmatpush1.bf16.msra.mxu0 0
        %1231 = vmatprep.subr.bf16.mxu0 0
        %1232 = vmatpush1.bf16.msra.mxu0 0
        %1233 = vmatprep.subr.bf16.mxu0 0
        %1234 = vmatpush1.bf16.msra.mxu0 0
        %1235 = vmatprep.subr.bf16.mxu0 0
        %1236 = vmatpush1.bf16.msra.mxu0 0
        %1237 = vmatprep.subr.bf16.mxu0 0
        %1238 = vmatpush1.bf16.msra.mxu0 0
        %1239 = vmatprep.subr.bf16.mxu0 0
        %1240 = vmatpush1.bf16.msra.mxu0 0
        %1241 = vmatprep.subr.bf16.mxu0 0
        %1242 = vmatpush1.bf16.msra.mxu0 0
        %1243 = vmatprep.subr.bf16.mxu0 0
        %1244 = vmatpush1.bf16.msra.mxu0 0
        %1245 = vmatprep.subr.bf16.mxu0 0
        %1246 = vmatpush1.bf16.msra.mxu0 0
        %1247 = vmatprep.subr.bf16.mxu0 0
        %1248 = vmatpush1.bf16.msra.mxu0 0
        %1249 = vmatprep.mubr.bf16.mxu0 0
        %1250 = vmatmul.mubr.bf16.gmra.mrb[0].mxu0 %v1215
        %v1251 = vpop.f32.mrb[0].mxu0
        %v1252 = vadd.f32 %v1187, %v1251
        %v1253 = vpop.f32.mrb[0].mxu0
        %v1254 = vpop.f32.mrb[0].mxu0
        %v1255 = vpop.f32.mrb[0].mxu0
        %1256 = vdwg.mxu0
        %v1257 = vadd.f32 %v1078, %v1252
        %1258 = vst.msk [vmem:[#allocation2] sm:$0xff] %vm704, %v1257
        %p1259 = scmp.eq.s32.totalorder %s35, 1
        // Predicated region
        $region89: #{midinet_forward.1} parent=83 // pred_check
          %p1260 = pneg %p1259
        $region90: #{midinet_forward.1} parent=83 // pred_check_branch
          %1262 = sbr.rel (%p1260) target = $region92
        $region91: #{midinet_forward.1} parent=83 // pred_region
          %v1263 = vpack.c.bf16 %v1257, %v1257
          %v1264 = vld [vmem:[%s14] sm:$0xf]
          %v1265 = vld [vmem:[%s14 + $0x4] sm:$0xf]
          %v1266 = vld [vmem:[%s14 + $0x8] sm:$0xf]
          %v1267 = vld [vmem:[%s14 + $0xc] sm:$0xf]
          %v1268 = vld [vmem:[%s15] sm:$0x1]
          %v1270 = vlaneseq
          %v1271 = vshrl.u32 %v1270, 7
          %v1272 = vsub.s32 0, %v1271
          %v1273 = vrot.slane %v1268, %v1272
          %v1279 = vunpack.c.l.b16 %v1264
          %v1280 = vunpack.c.l.b16 %v1265
          %v1281 = vunpack.c.l.b16 %v1266
          %v1282 = vunpack.c.l.b16 %v1267
          %v1283 = vpack.c.b16 %v1280, %v1279
          %v1284 = vpack.c.b16 %v1282, %v1281
          %v1288 = vsel %vm704, %v1263, 0
          %1290 = vmatprep.subr.bf16.mxu0 0
          %1291 = vmatpush1.bf16.msra.mxu0 %v1283
          %1292 = vmatprep.subr.bf16.mxu0 0
          %1293 = vmatpush1.bf16.msra.mxu0 %v1284
          %1294 = vmatprep.subr.bf16.mxu0 0
          %1295 = vmatpush1.bf16.msra.mxu0 0
          %1296 = vmatprep.subr.bf16.mxu0 0
          %1297 = vmatpush1.bf16.msra.mxu0 0
          %1298 = vmatprep.subr.bf16.mxu0 0
          %1299 = vmatpush1.bf16.msra.mxu0 0
          %1300 = vmatprep.subr.bf16.mxu0 0
          %1301 = vmatpush1.bf16.msra.mxu0 0
          %1302 = vmatprep.subr.bf16.mxu0 0
          %1303 = vmatpush1.bf16.msra.mxu0 0
          %1304 = vmatprep.subr.bf16.mxu0 0
          %1305 = vmatpush1.bf16.msra.mxu0 0
          %1306 = vmatprep.subr.bf16.mxu0 0
          %1307 = vmatpush1.bf16.msra.mxu0 0
          %1308 = vmatprep.subr.bf16.mxu0 0
          %1309 = vmatpush1.bf16.msra.mxu0 0
          %1310 = vmatprep.subr.bf16.mxu0 0
          %1311 = vmatpush1.bf16.msra.mxu0 0
          %1312 = vmatprep.subr.bf16.mxu0 0
          %1313 = vmatpush1.bf16.msra.mxu0 0
          %1314 = vmatprep.subr.bf16.mxu0 0
          %1315 = vmatpush1.bf16.msra.mxu0 0
          %1316 = vmatprep.subr.bf16.mxu0 0
          %1317 = vmatpush1.bf16.msra.mxu0 0
          %1318 = vmatprep.subr.bf16.mxu0 0
          %1319 = vmatpush1.bf16.msra.mxu0 0
          %1320 = vmatprep.subr.bf16.mxu0 0
          %1321 = vmatpush1.bf16.msra.mxu0 0
          %1322 = vmatprep.mubr.bf16.mxu0 0
          %1323 = vmatmul.mubr.bf16.gmra.mrb[0].mxu0 %v1288
          %v1324 = vpop.f32.mrb[0].mxu0
          %v1325 = vadd.f32 %v1273, %v1324
          %v1326 = vpop.f32.mrb[0].mxu0
          %v1327 = vpop.f32.mrb[0].mxu0
          %v1328 = vpop.f32.mrb[0].mxu0
          %1329 = vdwg.mxu0
          %1330 = vst [vmem:[%s650] sm:$0xff] %v1325
        $region92: #{midinet_forward.1} parent=83 // pred_fallthru
          _
        %s1331 = sand.u32 %s441, 1
        %s1332 = scalar_lea.sflag [#allocation4], %s1331
        %s1333 = sand.u32 %s441, 1
        %s1334 = smul.addr %s1333, 8
        %s1335 = scalar_lea.vmem [#allocation3], %s1334
        // Predicated region
        $region93: #{midinet_forward.1} parent=83 // pred_check
          %p1336 = pneg %p451
        $region94: #{midinet_forward.1} parent=83 // pred_check_branch
          %1338 = sbr.rel (%p1336) target = $region96
        $region95: #{midinet_forward.1} parent=83 // pred_region
          %s1340 = ssub.s32 128, 128
          %1341 = vsyncadd %s1332, %s1340
          %s1342 = smul.addr %s34, 128
          %s1343 = scalar_lea.hbm %s16, %s1342
          %s1345 = sshll.u32 %s1335, 4
          %s1346 = int_to_ptr.vmem [resolvable:$true] %s1345
          %1348 = dma.vmem_to_hbm [thread:$0]  %s1346, 128, %s1343, %s1332
        $region96: #{midinet_forward.1} parent=83 // pred_fallthru
          _
      $region84: #{midinet_forward.1} parent=5 // pred_fallthru
        _
      %p1349 = scmp.le.s32.totalorder 2, %s25
      // Predicated region
      $region97: #{midinet_forward.1} parent=5 // pred_check
        %p1350 = pneg %p1349
      $region98: #{midinet_forward.1} parent=5 // pred_check_branch
        %1352 = sbr.rel (%p1350) target = $region100
      $region99: #{midinet_forward.1} parent=5 // pred_region
        %s1353 = ssub.s32 %s25, 2
        // Predicated region
        $region101: #{midinet_forward.1} parent=99 // pred_check
          %p1354 = pneg %p457
        $region102: #{midinet_forward.1} parent=99 // pred_check_branch
          %1356 = sbr.rel (%p1354) target = $region104
        $region103: #{midinet_forward.1} parent=99 // pred_region
          %s1357 = sand.u32 %s442, 1
          %s1358 = scalar_lea.sflag [#allocation4], %s1357
          %s1359 = sand.u32 %s442, 1
          %s1360 = smul.addr %s1359, 8
          %s1361 = scalar_lea.vmem [#allocation3], %s1360
          %1362 = dma.done %s1358, 128
        $region104: #{midinet_forward.1} parent=99 // pred_fallthru
          _
      $region100: #{midinet_forward.1} parent=5 // pred_fallthru
        _
    $region6: #{midinet_forward.1} parent=1 // loop_footer
      %s29 = sadd.s32 1, %s25
    $region7: #{midinet_forward.1} parent=1 // loop_footer_branch
      %24 = sbr.rel target = $region3
    $region8: #{midinet_forward.1} parent=1 // loop_exit
      _
    %1363 = vsyncpa [#allocation4], 1
    %s1364 = scalar_lea.sflag [#allocation4], 1
    %1365 = vsyncpa %s1364, 1

</llo_original>
